<compile_context>
chip_gen: v7x
topology: tpu7x:2x2x1
jax: 0.10.0
libtpu: 0.0.40
codegen_flags: <defaults>
</compile_context>

<pallas_src>
import functools

import jax
import jax.numpy as jnp
from jax import lax
from jax.experimental import pallas as pl
from jax.experimental.pallas import tpu as pltpu

_MIB = 1024 * 1024


def _self_attention_kernel(x_ref, a_ref, wcol_ref, wv_ref, bv_ref, gamma_ref,
                           o_ref, xcd_ref, *, tq, compute_dtype):
    """One (batch b, query-tile qi) grid step.

    x_ref:    (1, C, HW) f32  full spatial slab of x for this batch element (resident per batch)
    a_ref:    (C, C)     cd   A = Wq^T Wk
    wcol_ref: (1, C)     f32  w = Wk^T bq  (column bias of the energy)
    wv_ref:   (C, C)     cd   value weight
    bv_ref:   (C, 1)     f32  value bias
    gamma_ref:(1, 1)     f32  gamma scalar (SMEM)
    o_ref:    (1, C, tq) out  output slab
    xcd_ref:  (C, HW)    cd   scratch: per-batch compute-dtype copy of x (cast hoisted out of qi)
    """
    cd = compute_dtype
    qi = pl.program_id(1)

    # The x block index only changes with the batch axis, so the f32 -> compute-dtype cast of
    # the (C, HW) slab is done once per batch and reused by every query tile (qi "arbitrary").
    @pl.when(qi == 0)
    def _():
        xcd_ref[...] = x_ref[0].astype(cd)

    x_kv = xcd_ref[...]                                        # (C, HW)  compute dtype
    hw = x_kv.shape[1]

    if tq == hw:                                               # single query tile (static branch)
        x_q = x_kv
        x_q_res = x_ref[0]                                     # (C, tq) f32 residual path
    else:                                                      # tq is a 128-multiple dividing HW
        q0 = pl.multiple_of(qi * tq, 128)
        x_q = xcd_ref[:, pl.ds(q0, tq)]                        # (C, tq)  compute dtype
        x_q_res = x_ref[0, :, pl.ds(q0, tq)]                   # (C, tq)  f32 residual path

    # m[i, c2] = sum_c1 x_q[c1, i] * A[c1, c2]   (contraction over C, MXU-friendly)
    m = lax.dot_general(x_q, a_ref[...],
                        (((0,), (0,)), ((), ())),
                        preferred_element_type=jnp.float32)    # (tq, C)
    m = (m + wcol_ref[...]).astype(cd)                         # fold in the (Wk^T bq) . x_j term

    # energy[i, j] = sum_c m[i, c] * x_kv[c, j]
    energy = lax.dot_general(m, x_kv,
                             (((1,), (0,)), ((), ())),
                             preferred_element_type=jnp.float32)   # (tq, HW)

    # Numerically stable softmax numerator; normalization is deferred to the (C, tq) side.
    energy = energy - jnp.max(energy, axis=-1, keepdims=True)
    p = jnp.exp(energy)                                        # (tq, HW) f32, values in (0, 1]
    p_cd = p.astype(cd)

    # Per-query sums directly in lane layout (1, tq) via a ones-row matmul (no relayout needed).
    l_row = lax.dot_general(jnp.ones((1, hw), dtype=cd), p_cd,
                            (((1,), (1,)), ((), ())),
                            preferred_element_type=jnp.float32)    # (1, tq)
    inv_row = pl.reciprocal(l_row, approx=(cd != jnp.float32))     # (1, tq), EUP slot

    # Apply (unnormalized) attention to raw x, then fold the value projection afterwards:
    #   out = Wv (x @ attn^T) + bv     (exact because softmax rows sum to 1)
    u = lax.dot_general(x_kv, p_cd,
                        (((1,), (1,)), ((), ())),
                        preferred_element_type=jnp.float32)        # (C, tq)
    u = (u * inv_row).astype(cd)                                   # deferred softmax normalization
    out = lax.dot_general(wv_ref[...], u,
                          (((1,), (0,)), ((), ())),
                          preferred_element_type=jnp.float32)      # (C, tq)
    out = out + bv_ref[...]

    o_ref[0] = (gamma_ref[0, 0] * out + x_q_res).astype(o_ref.dtype)


def _vmem_capacity_bytes():
    """Physical VMEM size of the local TPU (conservative 64 MiB fallback)."""
    try:
        info = pltpu.get_tpu_info()
        cap = getattr(info, "vmem_capacity_bytes", None)
        if cap:
            return int(cap)
    except Exception:
        pass
    return 64 * _MIB


def _pick_query_tile(hw, tq_cap):
    """Largest multiple of 128 dividing hw, capped at tq_cap; fall back to one full tile."""
    best = 0
    t = 128
    while t <= min(hw, tq_cap):
        if hw % t == 0:
            best = t
        t += 128
    if best:
        return best
    # TODO(synk): for large spatial sizes with hw % 128 != 0, pad HW to a 128 multiple instead
    # of materializing a full (hw, hw) energy tile in VMEM.
    return hw


@functools.partial(jax.jit, static_argnames=("tq", "compute_dtype", "out_dtype"))
def self_attention_nchw(x_nchw, wq, bq, wk, bk, wv, bv, gamma, *,
                        tq=None, compute_dtype=jnp.bfloat16, out_dtype=None):
    """SelfAttention forward on NCHW input. Weights are PyTorch Conv2d-1x1 style (out_c, in_c)."""
    del bk  # bk only adds a per-query-row constant to the energy; it cancels under softmax.
    B, C, H, W = x_nchw.shape
    HW = H * W
    out_dtype = x_nchw.dtype if out_dtype is None else out_dtype

    # Generation-aware tiling / scoped-VMEM budget (v5e/v6e: 128 MiB physical, v7x: 64 MiB).
    big_vmem = _vmem_capacity_bytes() >= 100 * _MIB
    tq_cap = 512 if big_vmem else 256
    vmem_limit = (96 if big_vmem else 44) * _MIB

    if tq is None:
        tq = _pick_query_tile(HW, tq_cap)
    if HW % tq != 0 or (tq != HW and tq % 128 != 0):
        tq = HW                       # fallback: single tile (tiny / odd spatial sizes)
    nq = HW // tq

    f32 = jnp.float32
    cd = compute_dtype
    x = x_nchw.reshape(B, C, HW).astype(f32)          # free reshape; NO HBM transpose

    # Refactor q/k projections so the energy contraction runs over C (MXU-friendly):
    #   energy = x^T (Wq^T Wk) x + (Wk^T bq)^T x + const(per softmax row, dropped)
    a = (wq.astype(f32).T @ wk.astype(f32)).astype(cd)            # (C, C)
    w_col = (wk.astype(f32).T @ bq.astype(f32)).reshape(1, C)     # (1, C) f32
    wv_c = wv.astype(cd)                                          # (C, C)
    bv_r = bv.astype(f32).reshape(C, 1)
    gamma_r = gamma.astype(f32).reshape(1, 1)

    grid_spec = pltpu.PrefetchScalarGridSpec(
        num_scalar_prefetch=0,
        grid=(B, nq),
        in_specs=[
            # Single x stream: full (C, HW) slab per batch.  Block index changes only with b,
            # so it is DMA'd once per batch and stays resident across all query tiles.
            pl.BlockSpec((1, C, HW), lambda b, q: (b, 0, 0)),
            pl.BlockSpec((C, C), lambda b, q: (0, 0)),            # A = Wq^T Wk
            pl.BlockSpec((1, C), lambda b, q: (0, 0)),            # Wk^T bq
            pl.BlockSpec((C, C), lambda b, q: (0, 0)),            # Wv
            pl.BlockSpec((C, 1), lambda b, q: (0, 0)),            # bv
            pl.BlockSpec((1, 1), lambda b, q: (0, 0),
                         memory_space=pltpu.SMEM),                # gamma scalar
        ],
        out_specs=pl.BlockSpec((1, C, tq), lambda b, q: (b, 0, q)),
        # Per-batch compute-dtype copy of x (the f32 -> cd cast hoisted out of the qi loop).
        scratch_shapes=[pltpu.VMEM((C, HW), cd)],
    )

    kernel = functools.partial(_self_attention_kernel, tq=tq, compute_dtype=cd)

    y = pl.pallas_call(
        kernel,
        out_shape=jax.ShapeDtypeStruct((B, C, HW), out_dtype),
        grid_spec=grid_spec,
        compiler_params=pltpu.CompilerParams(
            # Batch axis parallel (megacore); query-tile axis "arbitrary" because it carries the
            # per-batch compute-dtype x copy in scratch.
            dimension_semantics=("parallel", "arbitrary"),
            vmem_limit_bytes=vmem_limit,
        ),
    )(x, a, w_col, wv_c, bv_r, gamma_r)

    return y.reshape(B, C, H, W)


def _reference(x_nchw, wq, bq, wk, bk, wv, bv, gamma):
    """Pure-JAX reference mirroring the PyTorch forward exactly (NCHW)."""
    B, C, H, W = x_nchw.shape
    HW = H * W
    x = x_nchw.reshape(B, C, HW)
    q = jnp.einsum("oc,bcs->bos", wq, x) + bq[None, :, None]   # (B, Cq, HW)
    k = jnp.einsum("oc,bcs->bos", wk, x) + bk[None, :, None]   # (B, Cq, HW)
    v = jnp.einsum("oc,bcs->bos", wv, x) + bv[None, :, None]   # (B, C,  HW)
    energy = jnp.einsum("bci,bcj->bij", q, k)                  # (B, HW, HW)
    attn = jax.nn.softmax(energy, axis=-1)
    out = jnp.einsum("bcj,bij->bci", v, attn)                  # (B, C, HW)
    return (gamma[0] * out + x).reshape(B, C, H, W)


if __name__ == "__main__":
    B, C, H, W = 2, 128, 16, 16       # HW = 256, Cq = 16
    Cq = C // 8

    key = jax.random.PRNGKey(0)
    keys = jax.random.split(key, 8)
    x = jax.random.normal(keys[0], (B, C, H, W), dtype=jnp.float32)

    wq = jax.random.normal(keys[1], (Cq, C), dtype=jnp.float32) * 0.1
    bq = jax.random.normal(keys[2], (Cq,), dtype=jnp.float32) * 0.1
    wk = jax.random.normal(keys[3], (Cq, C), dtype=jnp.float32) * 0.1
    bk = jax.random.normal(keys[4], (Cq,), dtype=jnp.float32) * 0.1
    wv = jax.random.normal(keys[5], (C, C), dtype=jnp.float32) * 0.1
    bv = jax.random.normal(keys[6], (C,), dtype=jnp.float32) * 0.1
    # PyTorch inits gamma to 0 (output == x); use a nonzero value so the attention path
    # is actually exercised / checked.
    gamma = jnp.array([0.5], dtype=jnp.float32)

    y_ref = _reference(x, wq, bq, wk, bk, wv, bv, gamma)

    # f32 path, explicit tq=128 (2 query tiles per batch: exercises query tiling and reuse of the
    # hoisted per-batch cast scratch at qi > 0).  Tight correctness check.
    y32 = self_attention_nchw(x, wq, bq, wk, bk, wv, bv, gamma,
                              tq=128, compute_dtype=jnp.float32)
    y32 = jax.block_until_ready(y32)
    assert y32.shape == (B, C, H, W)
    assert jnp.allclose(y32, y_ref, atol=1e-3, rtol=1e-3), "f32 kernel mismatch vs reference"

    # bf16 matmul-operand path (perf default for v6e/v7x), generation-auto tile size.
    ybf = self_attention_nchw(x, wq, bq, wk, bk, wv, bv, gamma,
                              compute_dtype=jnp.bfloat16)
    ybf = jax.block_until_ready(ybf)
    assert jnp.allclose(ybf, y_ref, atol=1e-1, rtol=1e-1), "bf16 kernel mismatch vs reference"

    print("KERNEL_OK")
</pallas_src>

<mosaic_0001>
module attributes {stable_mosaic.version = 11 : i64} {
  func.func @_self_attention_kernel(%arg0: i32, %arg1: i32, %arg2: memref<1x128x256xf32, #tpu.memory_space<vmem>>, %arg3: memref<128x128xf32, #tpu.memory_space<vmem>>, %arg4: memref<1x128xf32, #tpu.memory_space<vmem>>, %arg5: memref<128x128xf32, #tpu.memory_space<vmem>>, %arg6: memref<128x1xf32, #tpu.memory_space<vmem>>, %arg7: memref<1x1xf32, #tpu.memory_space<smem>>, %arg8: memref<1x128x128xf32, #tpu.memory_space<vmem>>, %arg9: memref<128x256xf32, #tpu.memory_space<vmem>>) attributes {dimension_semantics = [#tpu.dimension_semantics<parallel>, #tpu.dimension_semantics<arbitrary>], iteration_bounds = array<i64: 2, 2>, scalar_prefetch = 0 : i64, scratch_operands = 1 : i64, tpu.core_type = #tpu.core_type<tc>, window_params = [{transform_indices = @transform_0, window_bounds = array<i64: 1, 128, 256>}, {pipeline_mode = #tpu.pipeline_mode<synchronous>, transform_indices = @transform_1, window_bounds = array<i64: 128, 128>}, {pipeline_mode = #tpu.pipeline_mode<synchronous>, transform_indices = @transform_2, window_bounds = array<i64: 1, 128>}, {pipeline_mode = #tpu.pipeline_mode<synchronous>, transform_indices = @transform_3, window_bounds = array<i64: 128, 128>}, {pipeline_mode = #tpu.pipeline_mode<synchronous>, transform_indices = @transform_4, window_bounds = array<i64: 128, 1>}, {transform_indices = @transform_5, window_bounds = array<i64: 1, 1>}, {transform_indices = @transform_6, window_bounds = array<i64: 1, 128, 128>}]} {
    %c0_i32 = arith.constant 0 : i32
    %0 = arith.cmpi eq, %arg1, %c0_i32 : i32
    %1 = arith.extui %0 : i1 to i32
    %c0_i32_0 = arith.constant 0 : i32
    %2 = arith.cmpi ne, %1, %c0_i32_0 : i32
    scf.if %2 {
      %c0_24 = arith.constant 0 : index
      %c0_25 = arith.constant 0 : index
      %c0_26 = arith.constant 0 : index
      %40 = vector.load %arg2[%c0_24, %c0_25, %c0_26] : memref<1x128x256xf32, #tpu.memory_space<vmem>>, vector<1x128x256xf32>
      %41 = vector.shape_cast %40 : vector<1x128x256xf32> to vector<128x256xf32>
      %c0_27 = arith.constant 0 : index
      %c0_28 = arith.constant 0 : index
      %42 = vector.load %arg9[%c0_27, %c0_28] : memref<128x256xf32, #tpu.memory_space<vmem>>, vector<128x256xf32>
      tpu.vector_store %arg9[%c0_27, %c0_28], %41 {strides = array<i32>} : memref<128x256xf32, #tpu.memory_space<vmem>>, vector<128x256xf32>,
    } else {
    }
    %c0 = arith.constant 0 : index
    %c0_1 = arith.constant 0 : index
    %3 = vector.load %arg9[%c0, %c0_1] : memref<128x256xf32, #tpu.memory_space<vmem>>, vector<128x256xf32>
    %c128_i32 = arith.constant 128 : i32
    %4 = arith.muli %arg1, %c128_i32 : i32
    %5 = tpu.assume_multiple %4, 128 : i32
    %c0_2 = arith.constant 0 : index
    %6 = arith.index_cast %5 : i32 to index
    %7 = vector.load %arg9[%c0_2, %6] : memref<128x256xf32, #tpu.memory_space<vmem>>, vector<128x128xf32>
    %c0_3 = arith.constant 0 : index
    %c0_4 = arith.constant 0 : index
    %8 = arith.index_cast %5 : i32 to index
    %9 = vector.load %arg2[%c0_3, %c0_4, %8] : memref<1x128x256xf32, #tpu.memory_space<vmem>>, vector<1x128x128xf32>
    %10 = vector.shape_cast %9 : vector<1x128x128xf32> to vector<128x128xf32>
    %c0_5 = arith.constant 0 : index
    %c0_6 = arith.constant 0 : index
    %11 = vector.load %arg3[%c0_5, %c0_6] : memref<128x128xf32, #tpu.memory_space<vmem>>, vector<128x128xf32>
    %cst = arith.constant dense<0.000000e+00> : vector<128x128xf32>
    %12 = tpu.matmul %7, %11, %cst {dimension_numbers = #tpu.dot_dimension_numbers<[0], [0], [1], [1], [0, 1, 1, 1], [], []>} : vector<128x128xf32>, vector<128x128xf32>, vector<128x128xf32> -> vector<128x128xf32>
    %c0_7 = arith.constant 0 : index
    %c0_8 = arith.constant 0 : index
    %13 = vector.load %arg4[%c0_7, %c0_8] : memref<1x128xf32, #tpu.memory_space<vmem>>, vector<1x128xf32>
    %14 = vector.broadcast %13 : vector<1x128xf32> to vector<128x128xf32>
    %15 = arith.addf %12, %14 : vector<128x128xf32>
    %cst_9 = arith.constant dense<0.000000e+00> : vector<128x256xf32>
    %16 = tpu.matmul %15, %3, %cst_9 {dimension_numbers = #tpu.dot_dimension_numbers<[1], [0], [0], [1], [0, 0, 1, 1], [], []>} : vector<128x128xf32>, vector<128x256xf32>, vector<128x256xf32> -> vector<128x256xf32>
    %cst_10 = arith.constant dense<0xFF800000> : vector<128xf32>
    %17 = vector.multi_reduction <maximumf>, %16, %cst_10 [1] : vector<128x256xf32> to vector<128xf32>
    %18 = vector.shape_cast %17 : vector<128xf32> to vector<128x1xf32>
    %19 = vector.broadcast %18 : vector<128x1xf32> to vector<128x256xf32>
    %20 = arith.subf %16, %19 : vector<128x256xf32>
    %21 = math.exp %20 : vector<128x256xf32>
    %cst_11 = arith.constant 1.000000e+00 : f32
    %22 = vector.broadcast %cst_11 : f32 to vector<1x256xf32>
    %cst_12 = arith.constant dense<0.000000e+00> : vector<1x128xf32>
    %23 = tpu.matmul %22, %21, %cst_12 {dimension_numbers = #tpu.dot_dimension_numbers<[1], [1], [0], [0], [0, 0, 1, 0], [], []>} : vector<1x256xf32>, vector<128x256xf32>, vector<1x128xf32> -> vector<1x128xf32>
    %24 = tpu.reciprocal %23 : vector<1x128xf32> -> vector<1x128xf32>
    %cst_13 = arith.constant dense<0.000000e+00> : vector<128x128xf32>
    %25 = tpu.matmul %3, %21, %cst_13 {dimension_numbers = #tpu.dot_dimension_numbers<[1], [1], [0], [0], [0, 0, 1, 0], [], []>} : vector<128x256xf32>, vector<128x256xf32>, vector<128x128xf32> -> vector<128x128xf32>
    %26 = vector.broadcast %24 : vector<1x128xf32> to vector<128x128xf32>
    %27 = arith.mulf %25, %26 : vector<128x128xf32>
    %c0_14 = arith.constant 0 : index
    %c0_15 = arith.constant 0 : index
    %28 = vector.load %arg5[%c0_14, %c0_15] : memref<128x128xf32, #tpu.memory_space<vmem>>, vector<128x128xf32>
    %cst_16 = arith.constant dense<0.000000e+00> : vector<128x128xf32>
    %29 = tpu.matmul %28, %27, %cst_16 {dimension_numbers = #tpu.dot_dimension_numbers<[1], [0], [0], [1], [0, 0, 1, 1], [], []>} : vector<128x128xf32>, vector<128x128xf32>, vector<128x128xf32> -> vector<128x128xf32>
    %c0_17 = arith.constant 0 : index
    %c0_18 = arith.constant 0 : index
    %30 = vector.load %arg6[%c0_17, %c0_18] : memref<128x1xf32, #tpu.memory_space<vmem>>, vector<128x1xf32>
    %31 = vector.broadcast %30 : vector<128x1xf32> to vector<128x128xf32>
    %32 = arith.addf %29, %31 : vector<128x128xf32>
    %c0_19 = arith.constant 0 : index
    %c0_20 = arith.constant 0 : index
    %33 = memref.load %arg7[%c0_19, %c0_20] : memref<1x1xf32, #tpu.memory_space<smem>>
    %34 = vector.broadcast %33 : f32 to vector<128x128xf32>
    %35 = arith.mulf %34, %32 : vector<128x128xf32>
    %36 = arith.addf %35, %10 : vector<128x128xf32>
    %c0_21 = arith.constant 0 : index
    %c0_22 = arith.constant 0 : index
    %c0_23 = arith.constant 0 : index
    %37 = vector.load %arg8[%c0_21, %c0_22, %c0_23] : memref<1x128x128xf32, #tpu.memory_space<vmem>>, vector<1x128x128xf32>
    %38 = vector.shape_cast %37 : vector<1x128x128xf32> to vector<128x128xf32>
    %39 = vector.shape_cast %36 : vector<128x128xf32> to vector<1x128x128xf32>
    tpu.vector_store %arg8[%c0_21, %c0_22, %c0_23], %39 {strides = array<i32>} : memref<1x128x128xf32, #tpu.memory_space<vmem>>, vector<1x128x128xf32>,
    return
  }
  func.func @transform_0(%arg0: i32, %arg1: i32) -> (i32, i32, i32) {
    %c0_i32 = arith.constant 0 : i32
    %c0_i32_0 = arith.constant 0 : i32
    %c0_i32_1 = arith.constant 0 : i32
    return %arg0, %c0_i32, %c0_i32_0 : i32, i32, i32
  }
  func.func @transform_1(%arg0: i32, %arg1: i32) -> (i32, i32) {
    %c0_i32 = arith.constant 0 : i32
    %c0_i32_0 = arith.constant 0 : i32
    %c0_i32_1 = arith.constant 0 : i32
    return %c0_i32, %c0_i32_0 : i32, i32
  }
  func.func @transform_2(%arg0: i32, %arg1: i32) -> (i32, i32) {
    %c0_i32 = arith.constant 0 : i32
    %c0_i32_0 = arith.constant 0 : i32
    %c0_i32_1 = arith.constant 0 : i32
    return %c0_i32, %c0_i32_0 : i32, i32
  }
  func.func @transform_3(%arg0: i32, %arg1: i32) -> (i32, i32) {
    %c0_i32 = arith.constant 0 : i32
    %c0_i32_0 = arith.constant 0 : i32
    %c0_i32_1 = arith.constant 0 : i32
    return %c0_i32, %c0_i32_0 : i32, i32
  }
  func.func @transform_4(%arg0: i32, %arg1: i32) -> (i32, i32) {
    %c0_i32 = arith.constant 0 : i32
    %c0_i32_0 = arith.constant 0 : i32
    %c0_i32_1 = arith.constant 0 : i32
    return %c0_i32, %c0_i32_0 : i32, i32
  }
  func.func @transform_5(%arg0: i32, %arg1: i32) -> (i32, i32) {
    %c0_i32 = arith.constant 0 : i32
    %c0_i32_0 = arith.constant 0 : i32
    %c0_i32_1 = arith.constant 0 : i32
    return %c0_i32, %c0_i32_0 : i32, i32
  }
  func.func @transform_6(%arg0: i32, %arg1: i32) -> (i32, i32, i32) {
    %c0_i32 = arith.constant 0 : i32
    %c0_i32_0 = arith.constant 0 : i32
    return %arg0, %c0_i32, %arg1 : i32, i32, i32
  }
}

</mosaic_0001>

<llo_original>
// kernel: self_attention_nchw.1
$region0: #{self_attention_nchw.1}
  #allocation0 [shape = 'u32[]', space=smem, size = 0x4, offset = 0x4, fixed_abs, tag = 'smem constant byte address 0x4 - core index']
  #allocation1 [shape = 'u32[144,128]{1,0:T(1,128)}', space=vmem, size = 0x12000, scoped, tag = 'internal scratch']
  #allocation2 [shape = 'f32[128,256]{1,0:T(8,128)}', space=vmem, size = 0x20000, scoped, tag = 'scratch operand']
  #allocation3 [shape = 'f32[1,1]{1,0:T(1,128)S(6)}', space=smem, size = 0x200, scoped, tag = 'scoped memory for self_attention_nchw.1']
  %s0 = inlined_call_operand.vmem [shape: f32[2,128,256], index: 0, kind: input, shape index: {}]
  %s1 = inlined_call_operand.vmem [shape: f32[128,128], index: 1, kind: input, shape index: {}]
  %s2 = inlined_call_operand.vmem [shape: f32[1,128], index: 2, kind: input, shape index: {}]
  %s3 = inlined_call_operand.vmem [shape: f32[128,128], index: 3, kind: input, shape index: {}]
  %s4 = inlined_call_operand.vmem [shape: f32[128,1], index: 4, kind: input, shape index: {}]
  %s5 = inlined_call_operand.<no memory space> [shape: f32[1,1], index: 5, kind: input, shape index: {}]
  %s6 = inlined_call_operand.vmem [shape: f32[2,128,256], index: 6, kind: output, shape index: {}]
  %s7 = sld [smem:[#allocation0]]
  $region95: #{self_attention_nchw.1} parent=0
    _
  %s9 = ssub.s32 1, %s7
  %s10 = scalar_select 0, %s9, %s7
  %11 = sst [smem:[#allocation3]] %s5
  $region1: #{self_attention_nchw.1} parent=0
    #allocation4 [shape = 'u8[131072]{0}', space=vmem, size = 0x20000, scoped, tag = 'output window, operand 0']
    loop: start=0, step=1, limit=6
    $region2: #{self_attention_nchw.1} parent=1 // loop_pre_header
      _
    $region3: #{self_attention_nchw.1} parent=1 // loop_header
      %s13 = sphi 0, %s17
      %p14 = scmp.ge.s32.totalorder %s13, 6
      %s20 = sphi 0, %s32
      %s21 = sphi 0, %s28
      %s22 = sphi 0, %s20
      %s23 = sphi 0, %s21
      %s24 = sphi 0, %s22
      %s25 = sphi 0, %s23
      %s35 = sphi 0, %s37
      %s38 = sphi 0, %s35
      %s39 = sphi 0, %s38
      %s55 = sphi 0, %s39
      %s59 = sphi 0, %s59
      %s61 = sphi 0, %s59
      %s62 = sphi 0, %s61
      %s76 = sphi 0, %s62
      %s80 = sphi 0, %s80
      %s82 = sphi 0, %s80
      %s83 = sphi 0, %s82
      %s97 = sphi 0, %s83
      %s101 = sphi 0, %s101
      %s103 = sphi 0, %s101
      %s104 = sphi 0, %s103
      %s118 = sphi 0, %s104
      %s122 = sphi 0, %s122
      %s124 = sphi 0, %s122
      %s125 = sphi 0, %s124
      %s139 = sphi 0, %s125
      %s143 = sphi 0, %s143
      %s145 = sphi 0, %s143
      %s146 = sphi 0, %s145
      %s160 = sphi 0, %s146
      %s168 = sphi 0, %s170
      %s171 = sphi 0, %s168
      %s172 = sphi 0, %s171
      %s188 = sphi 0, %s172
    $region4: #{self_attention_nchw.1} parent=1 // loop_header_branch
      %16 = sbr.rel (%p14) target = $region8
    $region5: #{self_attention_nchw.1} parent=1 // loop_body
      %s18 = ssub.s32 %s13, 1
      %s19 = ssub.s32 %s13, 2
      %s26 = sadd.s32 1, %s21
      %p27 = scmp.ge.s32.totalorder %s26, 2
      %s28 = scalar_select %p27, 0, %s26
      %s29 = sadd.s32 1, %s20
      %s30 = scalar_select %p27, %s29, %s20
      %p31 = scmp.ge.s32.totalorder %s30, 2
      %s32 = scalar_select %p31, 0, %s30
      %s33 = ssub.s32 %s20, %s32
      %p34 = scmp.eq.s32.totalorder %s33, 0
      %s36 = sadd.s32 %s35, 1
      %s37 = scalar_select %p34, %s35, %s36
      %p40 = pneg %p34
      %p41 = scmp.eq.s32.totalorder %s13, 3
      %p42 = por %p40, %p41
      %p43 = scmp.ne.s32.totalorder %s35, %s38
      %p44 = scmp.eq.s32.totalorder %s13, 0
      %p45 = por %p43, %p44
      %p46 = scmp.ne.s32.totalorder %s35, %s38
      %p47 = scmp.eq.s32.totalorder %s18, 3
      %p48 = por %p46, %p47
      %p49 = scmp.ne.s32.totalorder %s38, %s39
      %p50 = scmp.eq.s32.totalorder %s18, 0
      %p51 = por %p49, %p50
      %p52 = scmp.ne.s32.totalorder %s38, %s39
      %p53 = scmp.eq.s32.totalorder %s19, 3
      %p54 = por %p52, %p53
      %p56 = scmp.ne.s32.totalorder %s39, %s55
      %p57 = scmp.eq.s32.totalorder %s19, 0
      %p58 = por %p56, %p57
      %s60 = sadd.s32 %s59, 1
      %p63 = scmp.eq.s32.totalorder %s13, 3
      %p64 = scmp.ne.s32.totalorder %s59, %s61
      %p65 = scmp.eq.s32.totalorder %s13, 0
      %p66 = por %p64, %p65
      %p67 = scmp.ne.s32.totalorder %s59, %s61
      %p68 = scmp.eq.s32.totalorder %s18, 3
      %p69 = por %p67, %p68
      %p70 = scmp.ne.s32.totalorder %s61, %s62
      %p71 = scmp.eq.s32.totalorder %s18, 0
      %p72 = por %p70, %p71
      %p73 = scmp.ne.s32.totalorder %s61, %s62
      %p74 = scmp.eq.s32.totalorder %s19, 3
      %p75 = por %p73, %p74
      %p77 = scmp.ne.s32.totalorder %s62, %s76
      %p78 = scmp.eq.s32.totalorder %s19, 0
      %p79 = por %p77, %p78
      %s81 = sadd.s32 %s80, 1
      %p84 = scmp.eq.s32.totalorder %s13, 3
      %p85 = scmp.ne.s32.totalorder %s80, %s82
      %p86 = scmp.eq.s32.totalorder %s13, 0
      %p87 = por %p85, %p86
      %p88 = scmp.ne.s32.totalorder %s80, %s82
      %p89 = scmp.eq.s32.totalorder %s18, 3
      %p90 = por %p88, %p89
      %p91 = scmp.ne.s32.totalorder %s82, %s83
      %p92 = scmp.eq.s32.totalorder %s18, 0
      %p93 = por %p91, %p92
      %p94 = scmp.ne.s32.totalorder %s82, %s83
      %p95 = scmp.eq.s32.totalorder %s19, 3
      %p96 = por %p94, %p95
      %p98 = scmp.ne.s32.totalorder %s83, %s97
      %p99 = scmp.eq.s32.totalorder %s19, 0
      %p100 = por %p98, %p99
      %s102 = sadd.s32 %s101, 1
      %p105 = scmp.eq.s32.totalorder %s13, 3
      %p106 = scmp.ne.s32.totalorder %s101, %s103
      %p107 = scmp.eq.s32.totalorder %s13, 0
      %p108 = por %p106, %p107
      %p109 = scmp.ne.s32.totalorder %s101, %s103
      %p110 = scmp.eq.s32.totalorder %s18, 3
      %p111 = por %p109, %p110
      %p112 = scmp.ne.s32.totalorder %s103, %s104
      %p113 = scmp.eq.s32.totalorder %s18, 0
      %p114 = por %p112, %p113
      %p115 = scmp.ne.s32.totalorder %s103, %s104
      %p116 = scmp.eq.s32.totalorder %s19, 3
      %p117 = por %p115, %p116
      %p119 = scmp.ne.s32.totalorder %s104, %s118
      %p120 = scmp.eq.s32.totalorder %s19, 0
      %p121 = por %p119, %p120
      %s123 = sadd.s32 %s122, 1
      %p126 = scmp.eq.s32.totalorder %s13, 3
      %p127 = scmp.ne.s32.totalorder %s122, %s124
      %p128 = scmp.eq.s32.totalorder %s13, 0
      %p129 = por %p127, %p128
      %p130 = scmp.ne.s32.totalorder %s122, %s124
      %p131 = scmp.eq.s32.totalorder %s18, 3
      %p132 = por %p130, %p131
      %p133 = scmp.ne.s32.totalorder %s124, %s125
      %p134 = scmp.eq.s32.totalorder %s18, 0
      %p135 = por %p133, %p134
      %p136 = scmp.ne.s32.totalorder %s124, %s125
      %p137 = scmp.eq.s32.totalorder %s19, 3
      %p138 = por %p136, %p137
      %p140 = scmp.ne.s32.totalorder %s125, %s139
      %p141 = scmp.eq.s32.totalorder %s19, 0
      %p142 = por %p140, %p141
      %s144 = sadd.s32 %s143, 1
      %p147 = scmp.eq.s32.totalorder %s13, 3
      %p148 = scmp.ne.s32.totalorder %s143, %s145
      %p149 = scmp.eq.s32.totalorder %s13, 0
      %p150 = por %p148, %p149
      %p151 = scmp.ne.s32.totalorder %s143, %s145
      %p152 = scmp.eq.s32.totalorder %s18, 3
      %p153 = por %p151, %p152
      %p154 = scmp.ne.s32.totalorder %s145, %s146
      %p155 = scmp.eq.s32.totalorder %s18, 0
      %p156 = por %p154, %p155
      %p157 = scmp.ne.s32.totalorder %s145, %s146
      %p158 = scmp.eq.s32.totalorder %s19, 3
      %p159 = por %p157, %p158
      %p161 = scmp.ne.s32.totalorder %s146, %s160
      %p162 = scmp.eq.s32.totalorder %s19, 0
      %p163 = por %p161, %p162
      %s164 = ssub.s32 %s20, %s32
      %s165 = ssub.s32 %s21, %s28
      %s166 = sor.u32 %s164, %s165
      %p167 = scmp.eq.s32.totalorder %s166, 0
      %s169 = sadd.s32 %s168, 1
      %s170 = scalar_select %p167, %s168, %s169
      %p173 = pneg %p167
      %p174 = scmp.eq.s32.totalorder %s13, 3
      %p175 = por %p173, %p174
      %p176 = scmp.ne.s32.totalorder %s168, %s171
      %p177 = scmp.eq.s32.totalorder %s13, 0
      %p178 = por %p176, %p177
      %p179 = scmp.ne.s32.totalorder %s168, %s171
      %p180 = scmp.eq.s32.totalorder %s18, 3
      %p181 = por %p179, %p180
      %p182 = scmp.ne.s32.totalorder %s171, %s172
      %p183 = scmp.eq.s32.totalorder %s18, 0
      %p184 = por %p182, %p183
      %p185 = scmp.ne.s32.totalorder %s171, %s172
      %p186 = scmp.eq.s32.totalorder %s19, 3
      %p187 = por %p185, %p186
      %p189 = scmp.ne.s32.totalorder %s172, %s188
      %p190 = scmp.eq.s32.totalorder %s19, 0
      %p191 = por %p189, %p190
      %p192 = scmp.le.s32.totalorder 1, %s13
      %p193 = scmp.lt.s32.totalorder %s13, 5
      %p194 = pnand %p192, %p193
      %p195 = pneg %p194
      // Predicated region
      $region9: #{self_attention_nchw.1} parent=5 // pred_check
        _
      $region10: #{self_attention_nchw.1} parent=5 // pred_check_branch
        %197 = sbr.rel (%p194) target = $region12
      $region11: #{self_attention_nchw.1} parent=5 // pred_region
        %s198 = ssub.s32 %s13, 1
        // Predicated region
        $region13: #{self_attention_nchw.1} parent=11 // pred_check
          %p199 = pneg %p72
        $region14: #{self_attention_nchw.1} parent=11 // pred_check_branch
          %201 = sbr.rel (%p199) target = $region16
        $region15: #{self_attention_nchw.1} parent=11 // pred_region
          _
        $region16: #{self_attention_nchw.1} parent=11 // pred_fallthru
          _
        // Predicated region
        $region17: #{self_attention_nchw.1} parent=11 // pred_check
          %p202 = pneg %p93
        $region18: #{self_attention_nchw.1} parent=11 // pred_check_branch
          %204 = sbr.rel (%p202) target = $region20
        $region19: #{self_attention_nchw.1} parent=11 // pred_region
          _
        $region20: #{self_attention_nchw.1} parent=11 // pred_fallthru
          _
        // Predicated region
        $region21: #{self_attention_nchw.1} parent=11 // pred_check
          %p205 = pneg %p114
        $region22: #{self_attention_nchw.1} parent=11 // pred_check_branch
          %207 = sbr.rel (%p205) target = $region24
        $region23: #{self_attention_nchw.1} parent=11 // pred_region
          _
        $region24: #{self_attention_nchw.1} parent=11 // pred_fallthru
          _
        // Predicated region
        $region25: #{self_attention_nchw.1} parent=11 // pred_check
          %p208 = pneg %p135
        $region26: #{self_attention_nchw.1} parent=11 // pred_check_branch
          %210 = sbr.rel (%p208) target = $region28
        $region27: #{self_attention_nchw.1} parent=11 // pred_region
          _
        $region28: #{self_attention_nchw.1} parent=11 // pred_fallthru
          _
        // Predicated region
        $region29: #{self_attention_nchw.1} parent=11 // pred_check
          %p211 = pneg %p156
        $region30: #{self_attention_nchw.1} parent=11 // pred_check_branch
          %213 = sbr.rel (%p211) target = $region32
        $region31: #{self_attention_nchw.1} parent=11 // pred_region
          _
        $region32: #{self_attention_nchw.1} parent=11 // pred_fallthru
          _
      $region12: #{self_attention_nchw.1} parent=5 // pred_fallthru
        _
      %p214 = scmp.lt.s32.totalorder %s13, 4
      // Predicated region
      $region33: #{self_attention_nchw.1} parent=5 // pred_check
        %p215 = pneg %p214
      $region34: #{self_attention_nchw.1} parent=5 // pred_check_branch
        %217 = sbr.rel (%p215) target = $region36
      $region35: #{self_attention_nchw.1} parent=5 // pred_region
        // Predicated region
        $region37: #{self_attention_nchw.1} parent=35 // pred_check
          %p218 = pneg %p45
        $region38: #{self_attention_nchw.1} parent=35 // pred_check_branch
          %220 = sbr.rel (%p218) target = $region40
        $region39: #{self_attention_nchw.1} parent=35 // pred_region
          %p221 = scmp.lt.s32.totalorder %s20, 1
          %s222 = scalar_select %p221, %s20, 1
          %s223 = smul.addr %s222, 32
          %s224 = smul.addr %s223, 8
          %s225 = scalar_lea.vmem %s0, %s224
        $region40: #{self_attention_nchw.1} parent=35 // pred_fallthru
          _
      $region36: #{self_attention_nchw.1} parent=5 // pred_fallthru
        _
      %p226 = scmp.le.s32.totalorder 1, %s13
      %p227 = scmp.lt.s32.totalorder %s13, 5
      %p228 = pnand %p226, %p227
      %p229 = pneg %p228
      // Predicated region
      $region41: #{self_attention_nchw.1} parent=5 // pred_check
        _
      $region42: #{self_attention_nchw.1} parent=5 // pred_check_branch
        %231 = sbr.rel (%p228) target = $region44
      $region43: #{self_attention_nchw.1} parent=5 // pred_region
        %s232 = ssub.s32 %s13, 1
        %p233 = scmp.lt.s32.totalorder %s22, 1
        %s234 = scalar_select %p233, %s22, 1
        %s235 = smul.addr %s234, 32
        %s236 = smul.addr %s235, 8
        %s237 = scalar_lea.vmem %s0, %s236
        %p238 = pneg %p51
        %p239 = pneg %p48
        %p240 = pneg %p72
        %p241 = pneg %p69
        %p242 = pneg %p93
        %p243 = pneg %p90
        %p244 = pneg %p114
        %p245 = pneg %p111
        %p246 = pneg %p135
        %p247 = pneg %p132
        %p248 = pneg %p156
        %p249 = pneg %p153
        %p250 = pneg %p184
        %p251 = pneg %p181
        %s252 = sand.u32 %s171, 1
        %s253 = sand.u32 %s171, 1
        %s254 = smul.addr %s253, 128
        %s255 = scalar_lea.vmem [#allocation4], %s254
        %p256 = scmp.lt.s32.totalorder %s22, 1
        %s257 = scalar_select %p256, %s22, 1
        %s258 = smul.addr %s257, 32
        %s259 = smul.addr %s258, 8
        %s260 = scalar_lea.vmem %s0, %s259
        %p261 = scmp.eq.s32.totalorder %s23, 0
        // Predicated region
        $region45: #{self_attention_nchw.1} parent=43 // pred_check
          %p262 = pneg %p261
        $region46: #{self_attention_nchw.1} parent=43 // pred_check_branch
          %264 = sbr.rel (%p262) target = $region48
        $region47: #{self_attention_nchw.1} parent=43 // pred_region
          %v265 = vld [vmem:[%s260] sm:$0xff]
          %v266 = vld [vmem:[%s260 + $0x8] sm:$0xff]
          %v267 = vld [vmem:[%s260 + $0x10] sm:$0xff]
          %v268 = vld [vmem:[%s260 + $0x18] sm:$0xff]
          %v269 = vld [vmem:[%s260 + $0x20] sm:$0xff]
          %v270 = vld [vmem:[%s260 + $0x28] sm:$0xff]
          %v271 = vld [vmem:[%s260 + $0x30] sm:$0xff]
          %v272 = vld [vmem:[%s260 + $0x38] sm:$0xff]
          %v273 = vld [vmem:[%s260 + $0x40] sm:$0xff]
          %v274 = vld [vmem:[%s260 + $0x48] sm:$0xff]
          %v275 = vld [vmem:[%s260 + $0x50] sm:$0xff]
          %v276 = vld [vmem:[%s260 + $0x58] sm:$0xff]
          %v277 = vld [vmem:[%s260 + $0x60] sm:$0xff]
          %v278 = vld [vmem:[%s260 + $0x68] sm:$0xff]
          %v279 = vld [vmem:[%s260 + $0x70] sm:$0xff]
          %v280 = vld [vmem:[%s260 + $0x78] sm:$0xff]
          %v281 = vld [vmem:[%s260 + $0x80] sm:$0xff]
          %v282 = vld [vmem:[%s260 + $0x88] sm:$0xff]
          %v283 = vld [vmem:[%s260 + $0x90] sm:$0xff]
          %v284 = vld [vmem:[%s260 + $0x98] sm:$0xff]
          %v285 = vld [vmem:[%s260 + $0xa0] sm:$0xff]
          %v286 = vld [vmem:[%s260 + $0xa8] sm:$0xff]
          %v287 = vld [vmem:[%s260 + $0xb0] sm:$0xff]
          %v288 = vld [vmem:[%s260 + $0xb8] sm:$0xff]
          %v289 = vld [vmem:[%s260 + $0xc0] sm:$0xff]
          %v290 = vld [vmem:[%s260 + $0xc8] sm:$0xff]
          %v291 = vld [vmem:[%s260 + $0xd0] sm:$0xff]
          %v292 = vld [vmem:[%s260 + $0xd8] sm:$0xff]
          %v293 = vld [vmem:[%s260 + $0xe0] sm:$0xff]
          %v294 = vld [vmem:[%s260 + $0xe8] sm:$0xff]
          %v295 = vld [vmem:[%s260 + $0xf0] sm:$0xff]
          %v296 = vld [vmem:[%s260 + $0xf8] sm:$0xff]
          %297 = vst [vmem:[#allocation2] sm:$0xff] %v265
          %298 = vst [vmem:[#allocation2 + $0x8] sm:$0xff] %v266
          %299 = vst [vmem:[#allocation2 + $0x10] sm:$0xff] %v267
          %300 = vst [vmem:[#allocation2 + $0x18] sm:$0xff] %v268
          %301 = vst [vmem:[#allocation2 + $0x20] sm:$0xff] %v269
          %302 = vst [vmem:[#allocation2 + $0x28] sm:$0xff] %v270
          %303 = vst [vmem:[#allocation2 + $0x30] sm:$0xff] %v271
          %304 = vst [vmem:[#allocation2 + $0x38] sm:$0xff] %v272
          %305 = vst [vmem:[#allocation2 + $0x40] sm:$0xff] %v273
          %306 = vst [vmem:[#allocation2 + $0x48] sm:$0xff] %v274
          %307 = vst [vmem:[#allocation2 + $0x50] sm:$0xff] %v275
          %308 = vst [vmem:[#allocation2 + $0x58] sm:$0xff] %v276
          %309 = vst [vmem:[#allocation2 + $0x60] sm:$0xff] %v277
          %310 = vst [vmem:[#allocation2 + $0x68] sm:$0xff] %v278
          %311 = vst [vmem:[#allocation2 + $0x70] sm:$0xff] %v279
          %312 = vst [vmem:[#allocation2 + $0x78] sm:$0xff] %v280
          %313 = vst [vmem:[#allocation2 + $0x80] sm:$0xff] %v281
          %314 = vst [vmem:[#allocation2 + $0x88] sm:$0xff] %v282
          %315 = vst [vmem:[#allocation2 + $0x90] sm:$0xff] %v283
          %316 = vst [vmem:[#allocation2 + $0x98] sm:$0xff] %v284
          %317 = vst [vmem:[#allocation2 + $0xa0] sm:$0xff] %v285
          %318 = vst [vmem:[#allocation2 + $0xa8] sm:$0xff] %v286
          %319 = vst [vmem:[#allocation2 + $0xb0] sm:$0xff] %v287
          %320 = vst [vmem:[#allocation2 + $0xb8] sm:$0xff] %v288
          %321 = vst [vmem:[#allocation2 + $0xc0] sm:$0xff] %v289
          %322 = vst [vmem:[#allocation2 + $0xc8] sm:$0xff] %v290
          %323 = vst [vmem:[#allocation2 + $0xd0] sm:$0xff] %v291
          %324 = vst [vmem:[#allocation2 + $0xd8] sm:$0xff] %v292
          %325 = vst [vmem:[#allocation2 + $0xe0] sm:$0xff] %v293
          %326 = vst [vmem:[#allocation2 + $0xe8] sm:$0xff] %v294
          %327 = vst [vmem:[#allocation2 + $0xf0] sm:$0xff] %v295
          %328 = vst [vmem:[#allocation2 + $0xf8] sm:$0xff] %v296
        $region48: #{self_attention_nchw.1} parent=43 // pred_fallthru
          _
        %v329 = vld [vmem:[#allocation2] sm:$0xff]
        %v330 = vld [vmem:[#allocation2 + $0x8] sm:$0xff]
        %v331 = vld [vmem:[#allocation2 + $0x10] sm:$0xff]
        %v332 = vld [vmem:[#allocation2 + $0x18] sm:$0xff]
        %v333 = vld [vmem:[#allocation2 + $0x20] sm:$0xff]
        %v334 = vld [vmem:[#allocation2 + $0x28] sm:$0xff]
        %v335 = vld [vmem:[#allocation2 + $0x30] sm:$0xff]
        %v336 = vld [vmem:[#allocation2 + $0x38] sm:$0xff]
        %v337 = vld [vmem:[#allocation2 + $0x40] sm:$0xff]
        %v338 = vld [vmem:[#allocation2 + $0x48] sm:$0xff]
        %v339 = vld [vmem:[#allocation2 + $0x50] sm:$0xff]
        %v340 = vld [vmem:[#allocation2 + $0x58] sm:$0xff]
        %v341 = vld [vmem:[#allocation2 + $0x60] sm:$0xff]
        %v342 = vld [vmem:[#allocation2 + $0x68] sm:$0xff]
        %v343 = vld [vmem:[#allocation2 + $0x70] sm:$0xff]
        %v344 = vld [vmem:[#allocation2 + $0x78] sm:$0xff]
        %v345 = vld [vmem:[#allocation2 + $0x80] sm:$0xff]
        %v346 = vld [vmem:[#allocation2 + $0x88] sm:$0xff]
        %v347 = vld [vmem:[#allocation2 + $0x90] sm:$0xff]
        %v348 = vld [vmem:[#allocation2 + $0x98] sm:$0xff]
        %v349 = vld [vmem:[#allocation2 + $0xa0] sm:$0xff]
        %v350 = vld [vmem:[#allocation2 + $0xa8] sm:$0xff]
        %v351 = vld [vmem:[#allocation2 + $0xb0] sm:$0xff]
        %v352 = vld [vmem:[#allocation2 + $0xb8] sm:$0xff]
        %v353 = vld [vmem:[#allocation2 + $0xc0] sm:$0xff]
        %v354 = vld [vmem:[#allocation2 + $0xc8] sm:$0xff]
        %v355 = vld [vmem:[#allocation2 + $0xd0] sm:$0xff]
        %v356 = vld [vmem:[#allocation2 + $0xd8] sm:$0xff]
        %v357 = vld [vmem:[#allocation2 + $0xe0] sm:$0xff]
        %v358 = vld [vmem:[#allocation2 + $0xe8] sm:$0xff]
        %v359 = vld [vmem:[#allocation2 + $0xf0] sm:$0xff]
        %v360 = vld [vmem:[#allocation2 + $0xf8] sm:$0xff]
        %s361 = smul.u32 %s23, 128
        %s362 = sshra.s32 %s361, 7
        %s363 = sand.u32 %s361, 127
        %s364 = smul.addr %s362, 8
        %s365 = scalar_lea.vmem [#allocation2], %s364
        %v366 = vld [vmem:[%s365] sm:$0xff]
        %v367 = vld [vmem:[%s365 + $0x10] sm:$0xff]
        %v368 = vld [vmem:[%s365 + $0x20] sm:$0xff]
        %v369 = vld [vmem:[%s365 + $0x30] sm:$0xff]
        %v370 = vld [vmem:[%s365 + $0x40] sm:$0xff]
        %v371 = vld [vmem:[%s365 + $0x50] sm:$0xff]
        %v372 = vld [vmem:[%s365 + $0x60] sm:$0xff]
        %v373 = vld [vmem:[%s365 + $0x70] sm:$0xff]
        %v374 = vld [vmem:[%s365 + $0x80] sm:$0xff]
        %v375 = vld [vmem:[%s365 + $0x90] sm:$0xff]
        %v376 = vld [vmem:[%s365 + $0xa0] sm:$0xff]
        %v377 = vld [vmem:[%s365 + $0xb0] sm:$0xff]
        %v378 = vld [vmem:[%s365 + $0xc0] sm:$0xff]
        %v379 = vld [vmem:[%s365 + $0xd0] sm:$0xff]
        %v380 = vld [vmem:[%s365 + $0xe0] sm:$0xff]
        %v381 = vld [vmem:[%s365 + $0xf0] sm:$0xff]
        %s382 = smul.addr %s362, 8
        %s383 = scalar_lea.vmem %s260, %s382
        %v384 = vld [vmem:[%s383] sm:$0xff]
        %v385 = vld [vmem:[%s383 + $0x10] sm:$0xff]
        %v386 = vld [vmem:[%s383 + $0x20] sm:$0xff]
        %v387 = vld [vmem:[%s383 + $0x30] sm:$0xff]
        %v388 = vld [vmem:[%s383 + $0x40] sm:$0xff]
        %v389 = vld [vmem:[%s383 + $0x50] sm:$0xff]
        %v390 = vld [vmem:[%s383 + $0x60] sm:$0xff]
        %v391 = vld [vmem:[%s383 + $0x70] sm:$0xff]
        %v392 = vld [vmem:[%s383 + $0x80] sm:$0xff]
        %v393 = vld [vmem:[%s383 + $0x90] sm:$0xff]
        %v394 = vld [vmem:[%s383 + $0xa0] sm:$0xff]
        %v395 = vld [vmem:[%s383 + $0xb0] sm:$0xff]
        %v396 = vld [vmem:[%s383 + $0xc0] sm:$0xff]
        %v397 = vld [vmem:[%s383 + $0xd0] sm:$0xff]
        %v398 = vld [vmem:[%s383 + $0xe0] sm:$0xff]
        %v399 = vld [vmem:[%s383 + $0xf0] sm:$0xff]
        %v400 = vld [vmem:[%s1] sm:$0xff]
        %v401 = vld [vmem:[%s1 + $0x8] sm:$0xff]
        %v402 = vld [vmem:[%s1 + $0x10] sm:$0xff]
        %v403 = vld [vmem:[%s1 + $0x18] sm:$0xff]
        %v404 = vld [vmem:[%s1 + $0x20] sm:$0xff]
        %v405 = vld [vmem:[%s1 + $0x28] sm:$0xff]
        %v406 = vld [vmem:[%s1 + $0x30] sm:$0xff]
        %v407 = vld [vmem:[%s1 + $0x38] sm:$0xff]
        %v408 = vld [vmem:[%s1 + $0x40] sm:$0xff]
        %v409 = vld [vmem:[%s1 + $0x48] sm:$0xff]
        %v410 = vld [vmem:[%s1 + $0x50] sm:$0xff]
        %v411 = vld [vmem:[%s1 + $0x58] sm:$0xff]
        %v412 = vld [vmem:[%s1 + $0x60] sm:$0xff]
        %v413 = vld [vmem:[%s1 + $0x68] sm:$0xff]
        %v414 = vld [vmem:[%s1 + $0x70] sm:$0xff]
        %v415 = vld [vmem:[%s1 + $0x78] sm:$0xff]
        %v416 = vld [vmem:[%s2] sm:$0x1]
        %v418 = vlaneseq
        %v419 = vshrl.u32 %v418, 7
        %v420 = vsub.s32 0, %v419
        %v421 = vrot.slane %v416, %v420
        %423 = vxpose.xlu0.b32.start [1/16] %v366, 128
        %424 = vxpose.xlu0.b32.cont [2/16] %v367, 128
        %425 = vxpose.xlu0.b32.cont [3/16] %v368, 128
        %426 = vxpose.xlu0.b32.cont [4/16] %v369, 128
        %427 = vxpose.xlu0.b32.cont [5/16] %v370, 128
        %428 = vxpose.xlu0.b32.cont [6/16] %v371, 128
        %429 = vxpose.xlu0.b32.cont [7/16] %v372, 128
        %430 = vxpose.xlu0.b32.cont [8/16] %v373, 128
        %431 = vxpose.xlu0.b32.cont [9/16] %v374, 128
        %432 = vxpose.xlu0.b32.cont [10/16] %v375, 128
        %433 = vxpose.xlu0.b32.cont [11/16] %v376, 128
        %434 = vxpose.xlu0.b32.cont [12/16] %v377, 128
        %435 = vxpose.xlu0.b32.cont [13/16] %v378, 128
        %436 = vxpose.xlu0.b32.cont [14/16] %v379, 128
        %437 = vxpose.xlu0.b32.cont [15/16] %v380, 128
        %438 = vxpose.xlu0.b32.end [16/16] %v381, 128
        %v439 = vpop.trf.xlu0
        %v440 = vpop.trf.xlu0
        %v441 = vpop.trf.xlu0
        %v442 = vpop.trf.xlu0
        %v443 = vpop.trf.xlu0
        %v444 = vpop.trf.xlu0
        %v445 = vpop.trf.xlu0
        %v446 = vpop.trf.xlu0
        %v447 = vpop.trf.xlu0
        %v448 = vpop.trf.xlu0
        %v449 = vpop.trf.xlu0
        %v450 = vpop.trf.xlu0
        %v451 = vpop.trf.xlu0
        %v452 = vpop.trf.xlu0
        %v453 = vpop.trf.xlu0
        %v454 = vpop.trf.xlu0
        %455 = vmatprep.subr.mxu0 0.0
        %456 = vmatpush1.msra.mxu0 %v400
        %457 = vmatprep.subr.mxu0 0.0
        %458 = vmatpush1.msra.mxu0 %v401
        %459 = vmatprep.subr.mxu0 0.0
        %460 = vmatpush1.msra.mxu0 %v402
        %461 = vmatprep.subr.mxu0 0.0
        %462 = vmatpush1.msra.mxu0 %v403
        %463 = vmatprep.subr.mxu0 0.0
        %464 = vmatpush1.msra.mxu0 %v404
        %465 = vmatprep.subr.mxu0 0.0
        %466 = vmatpush1.msra.mxu0 %v405
        %467 = vmatprep.subr.mxu0 0.0
        %468 = vmatpush1.msra.mxu0 %v406
        %469 = vmatprep.subr.mxu0 0.0
        %470 = vmatpush1.msra.mxu0 %v407
        %471 = vmatprep.subr.mxu0 0.0
        %472 = vmatpush1.msra.mxu0 %v408
        %473 = vmatprep.subr.mxu0 0.0
        %474 = vmatpush1.msra.mxu0 %v409
        %475 = vmatprep.subr.mxu0 0.0
        %476 = vmatpush1.msra.mxu0 %v410
        %477 = vmatprep.subr.mxu0 0.0
        %478 = vmatpush1.msra.mxu0 %v411
        %479 = vmatprep.subr.mxu0 0.0
        %480 = vmatpush1.msra.mxu0 %v412
        %481 = vmatprep.subr.mxu0 0.0
        %482 = vmatpush1.msra.mxu0 %v413
        %483 = vmatprep.subr.mxu0 0.0
        %484 = vmatpush1.msra.mxu0 %v414
        %485 = vmatprep.subr.mxu0 0.0
        %486 = vmatpush1.msra.mxu0 %v415
        %487 = vmatprep.subr.mxu0 0.0
        %488 = vmatpush1.msra.mxu0 0.0
        %489 = vmatprep.subr.mxu0 0.0
        %490 = vmatpush1.msra.mxu0 0.0
        %491 = vmatprep.subr.mxu0 0.0
        %492 = vmatpush1.msra.mxu0 0.0
        %493 = vmatprep.subr.mxu0 0.0
        %494 = vmatpush1.msra.mxu0 0.0
        %495 = vmatprep.subr.mxu0 0.0
        %496 = vmatpush1.msra.mxu0 0.0
        %497 = vmatprep.subr.mxu0 0.0
        %498 = vmatpush1.msra.mxu0 0.0
        %499 = vmatprep.subr.mxu0 0.0
        %500 = vmatpush1.msra.mxu0 0.0
        %501 = vmatprep.subr.mxu0 0.0
        %502 = vmatpush1.msra.mxu0 0.0
        %503 = vmatprep.subr.mxu0 0.0
        %504 = vmatpush1.msra.mxu0 0.0
        %505 = vmatprep.subr.mxu0 0.0
        %506 = vmatpush1.msra.mxu0 0.0
        %507 = vmatprep.subr.mxu0 0.0
        %508 = vmatpush1.msra.mxu0 0.0
        %509 = vmatprep.subr.mxu0 0.0
        %510 = vmatpush1.msra.mxu0 0.0
        %511 = vmatprep.subr.mxu0 0.0
        %512 = vmatpush1.msra.mxu0 0.0
        %513 = vmatprep.subr.mxu0 0.0
        %514 = vmatpush1.msra.mxu0 0.0
        %515 = vmatprep.subr.mxu0 0.0
        %516 = vmatpush1.msra.mxu0 0.0
        %517 = vmatprep.subr.mxu0 0.0
        %518 = vmatpush1.msra.mxu0 0.0
        %519 = vmatprep.mubr.f32.mxu0 0.0
        %520 = vmatmul.mubr.f32.gmra.mrb[0].mxu0 %v439
        %v521 = vpop.f32.mrb[0].mxu0
        %v522 = vadd.f32 %v421, %v521
        %v523 = vpop.f32.mrb[0].mxu0
        %524 = vmatprep.mubr.f32.mxu0 0.0
        %525 = vmatmul.mubr.f32.gmra.mrb[0].mxu0 %v440
        %v526 = vpop.f32.mrb[0].mxu0
        %v527 = vadd.f32 %v421, %v526
        %v528 = vpop.f32.mrb[0].mxu0
        %529 = vmatprep.mubr.f32.mxu0 0.0
        %530 = vmatmul.mubr.f32.gmra.mrb[0].mxu0 %v441
        %v531 = vpop.f32.mrb[0].mxu0
        %v532 = vadd.f32 %v421, %v531
        %v533 = vpop.f32.mrb[0].mxu0
        %534 = vmatprep.mubr.f32.mxu0 0.0
        %535 = vmatmul.mubr.f32.gmra.mrb[0].mxu0 %v442
        %v536 = vpop.f32.mrb[0].mxu0
        %v537 = vadd.f32 %v421, %v536
        %v538 = vpop.f32.mrb[0].mxu0
        %539 = vmatprep.mubr.f32.mxu0 0.0
        %540 = vmatmul.mubr.f32.gmra.mrb[0].mxu0 %v443
        %v541 = vpop.f32.mrb[0].mxu0
        %v542 = vadd.f32 %v421, %v541
        %v543 = vpop.f32.mrb[0].mxu0
        %544 = vmatprep.mubr.f32.mxu0 0.0
        %545 = vmatmul.mubr.f32.gmra.mrb[0].mxu0 %v444
        %v546 = vpop.f32.mrb[0].mxu0
        %v547 = vadd.f32 %v421, %v546
        %v548 = vpop.f32.mrb[0].mxu0
        %549 = vmatprep.mubr.f32.mxu0 0.0
        %550 = vmatmul.mubr.f32.gmra.mrb[0].mxu0 %v445
        %v551 = vpop.f32.mrb[0].mxu0
        %v552 = vadd.f32 %v421, %v551
        %v553 = vpop.f32.mrb[0].mxu0
        %554 = vmatprep.mubr.f32.mxu0 0.0
        %555 = vmatmul.mubr.f32.gmra.mrb[0].mxu0 %v446
        %v556 = vpop.f32.mrb[0].mxu0
        %v557 = vadd.f32 %v421, %v556
        %v558 = vpop.f32.mrb[0].mxu0
        %559 = vmatprep.mubr.f32.mxu0 0.0
        %560 = vmatmul.mubr.f32.gmra.mrb[0].mxu0 %v447
        %v561 = vpop.f32.mrb[0].mxu0
        %v562 = vadd.f32 %v421, %v561
        %v563 = vpop.f32.mrb[0].mxu0
        %564 = vmatprep.mubr.f32.mxu0 0.0
        %565 = vmatmul.mubr.f32.gmra.mrb[0].mxu0 %v448
        %v566 = vpop.f32.mrb[0].mxu0
        %v567 = vadd.f32 %v421, %v566
        %v568 = vpop.f32.mrb[0].mxu0
        %569 = vmatprep.mubr.f32.mxu0 0.0
        %570 = vmatmul.mubr.f32.gmra.mrb[0].mxu0 %v449
        %v571 = vpop.f32.mrb[0].mxu0
        %v572 = vadd.f32 %v421, %v571
        %v573 = vpop.f32.mrb[0].mxu0
        %574 = vmatprep.mubr.f32.mxu0 0.0
        %575 = vmatmul.mubr.f32.gmra.mrb[0].mxu0 %v450
        %v576 = vpop.f32.mrb[0].mxu0
        %v577 = vadd.f32 %v421, %v576
        %v578 = vpop.f32.mrb[0].mxu0
        %579 = vmatprep.mubr.f32.mxu0 0.0
        %580 = vmatmul.mubr.f32.gmra.mrb[0].mxu0 %v451
        %v581 = vpop.f32.mrb[0].mxu0
        %v582 = vadd.f32 %v421, %v581
        %v583 = vpop.f32.mrb[0].mxu0
        %584 = vmatprep.mubr.f32.mxu0 0.0
        %585 = vmatmul.mubr.f32.gmra.mrb[0].mxu0 %v452
        %v586 = vpop.f32.mrb[0].mxu0
        %v587 = vadd.f32 %v421, %v586
        %v588 = vpop.f32.mrb[0].mxu0
        %589 = vmatprep.mubr.f32.mxu0 0.0
        %590 = vmatmul.mubr.f32.gmra.mrb[0].mxu0 %v453
        %v591 = vpop.f32.mrb[0].mxu0
        %v592 = vadd.f32 %v421, %v591
        %v593 = vpop.f32.mrb[0].mxu0
        %594 = vmatprep.mubr.f32.mxu0 0.0
        %595 = vmatmul.mubr.f32.gmra.mrb[0].mxu0 %v454
        %v596 = vpop.f32.mrb[0].mxu0
        %v597 = vadd.f32 %v421, %v596
        %v598 = vpop.f32.mrb[0].mxu0
        %599 = vdwg.mxu0
        %600 = vmatprep.subr.mxu0 %v330
        %601 = vmatpush1.msra.mxu0 %v329
        %602 = vmatprep.subr.mxu0 %v332
        %603 = vmatpush1.msra.mxu0 %v331
        %604 = vmatprep.subr.mxu0 %v334
        %605 = vmatpush1.msra.mxu0 %v333
        %606 = vmatprep.subr.mxu0 %v336
        %607 = vmatpush1.msra.mxu0 %v335
        %608 = vmatprep.subr.mxu0 %v338
        %609 = vmatpush1.msra.mxu0 %v337
        %610 = vmatprep.subr.mxu0 %v340
        %611 = vmatpush1.msra.mxu0 %v339
        %612 = vmatprep.subr.mxu0 %v342
        %613 = vmatpush1.msra.mxu0 %v341
        %614 = vmatprep.subr.mxu0 %v344
        %615 = vmatpush1.msra.mxu0 %v343
        %616 = vmatprep.subr.mxu0 %v346
        %617 = vmatpush1.msra.mxu0 %v345
        %618 = vmatprep.subr.mxu0 %v348
        %619 = vmatpush1.msra.mxu0 %v347
        %620 = vmatprep.subr.mxu0 %v350
        %621 = vmatpush1.msra.mxu0 %v349
        %622 = vmatprep.subr.mxu0 %v352
        %623 = vmatpush1.msra.mxu0 %v351
        %624 = vmatprep.subr.mxu0 %v354
        %625 = vmatpush1.msra.mxu0 %v353
        %626 = vmatprep.subr.mxu0 %v356
        %627 = vmatpush1.msra.mxu0 %v355
        %628 = vmatprep.subr.mxu0 %v358
        %629 = vmatpush1.msra.mxu0 %v357
        %630 = vmatprep.subr.mxu0 %v360
        %631 = vmatpush1.msra.mxu0 %v359
        %632 = vmatprep.subr.mxu0 0.0
        %633 = vmatpush1.msra.mxu0 0.0
        %634 = vmatprep.subr.mxu0 0.0
        %635 = vmatpush1.msra.mxu0 0.0
        %636 = vmatprep.subr.mxu0 0.0
        %637 = vmatpush1.msra.mxu0 0.0
        %638 = vmatprep.subr.mxu0 0.0
        %639 = vmatpush1.msra.mxu0 0.0
        %640 = vmatprep.subr.mxu0 0.0
        %641 = vmatpush1.msra.mxu0 0.0
        %642 = vmatprep.subr.mxu0 0.0
        %643 = vmatpush1.msra.mxu0 0.0
        %644 = vmatprep.subr.mxu0 0.0
        %645 = vmatpush1.msra.mxu0 0.0
        %646 = vmatprep.subr.mxu0 0.0
        %647 = vmatpush1.msra.mxu0 0.0
        %648 = vmatprep.subr.mxu0 0.0
        %649 = vmatpush1.msra.mxu0 0.0
        %650 = vmatprep.subr.mxu0 0.0
        %651 = vmatpush1.msra.mxu0 0.0
        %652 = vmatprep.subr.mxu0 0.0
        %653 = vmatpush1.msra.mxu0 0.0
        %654 = vmatprep.subr.mxu0 0.0
        %655 = vmatpush1.msra.mxu0 0.0
        %656 = vmatprep.subr.mxu0 0.0
        %657 = vmatpush1.msra.mxu0 0.0
        %658 = vmatprep.subr.mxu0 0.0
        %659 = vmatpush1.msra.mxu0 0.0
        %660 = vmatprep.subr.mxu0 0.0
        %661 = vmatpush1.msra.mxu0 0.0
        %662 = vmatprep.subr.mxu0 0.0
        %663 = vmatpush1.msra.mxu0 0.0
        %664 = vmatprep.mubr.f32.mxu0 0.0
        %665 = vmatmul.mubr.f32.gmra.mrb[0].mxu0 %v522
        %v666 = vpop.f32.mrb[0].mxu0
        %v667 = vadd.f32 0.0, %v666
        %v668 = vpop.f32.mrb[0].mxu0
        %v669 = vadd.f32 0.0, %v668
        %670 = vmatprep.mubr.f32.mxu0 0.0
        %671 = vmatmul.mubr.f32.gmra.mrb[0].mxu0 %v527
        %v672 = vpop.f32.mrb[0].mxu0
        %v673 = vadd.f32 0.0, %v672
        %v674 = vpop.f32.mrb[0].mxu0
        %v675 = vadd.f32 0.0, %v674
        %676 = vmatprep.mubr.f32.mxu0 0.0
        %677 = vmatmul.mubr.f32.gmra.mrb[0].mxu0 %v532
        %v678 = vpop.f32.mrb[0].mxu0
        %v679 = vadd.f32 0.0, %v678
        %v680 = vpop.f32.mrb[0].mxu0
        %v681 = vadd.f32 0.0, %v680
        %682 = vmatprep.mubr.f32.mxu0 0.0
        %683 = vmatmul.mubr.f32.gmra.mrb[0].mxu0 %v537
        %v684 = vpop.f32.mrb[0].mxu0
        %v685 = vadd.f32 0.0, %v684
        %v686 = vpop.f32.mrb[0].mxu0
        %v687 = vadd.f32 0.0, %v686
        %688 = vmatprep.mubr.f32.mxu0 0.0
        %689 = vmatmul.mubr.f32.gmra.mrb[0].mxu0 %v542
        %v690 = vpop.f32.mrb[0].mxu0
        %v691 = vadd.f32 0.0, %v690
        %v692 = vpop.f32.mrb[0].mxu0
        %v693 = vadd.f32 0.0, %v692
        %694 = vmatprep.mubr.f32.mxu0 0.0
        %695 = vmatmul.mubr.f32.gmra.mrb[0].mxu0 %v547
        %v696 = vpop.f32.mrb[0].mxu0
        %v697 = vadd.f32 0.0, %v696
        %v698 = vpop.f32.mrb[0].mxu0
        %v699 = vadd.f32 0.0, %v698
        %700 = vmatprep.mubr.f32.mxu0 0.0
        %701 = vmatmul.mubr.f32.gmra.mrb[0].mxu0 %v552
        %v702 = vpop.f32.mrb[0].mxu0
        %v703 = vadd.f32 0.0, %v702
        %v704 = vpop.f32.mrb[0].mxu0
        %v705 = vadd.f32 0.0, %v704
        %706 = vmatprep.mubr.f32.mxu0 0.0
        %707 = vmatmul.mubr.f32.gmra.mrb[0].mxu0 %v557
        %v708 = vpop.f32.mrb[0].mxu0
        %v709 = vadd.f32 0.0, %v708
        %v710 = vpop.f32.mrb[0].mxu0
        %v711 = vadd.f32 0.0, %v710
        %712 = vmatprep.mubr.f32.mxu0 0.0
        %713 = vmatmul.mubr.f32.gmra.mrb[0].mxu0 %v562
        %v714 = vpop.f32.mrb[0].mxu0
        %v715 = vadd.f32 0.0, %v714
        %v716 = vpop.f32.mrb[0].mxu0
        %v717 = vadd.f32 0.0, %v716
        %718 = vmatprep.mubr.f32.mxu0 0.0
        %719 = vmatmul.mubr.f32.gmra.mrb[0].mxu0 %v567
        %v720 = vpop.f32.mrb[0].mxu0
        %v721 = vadd.f32 0.0, %v720
        %v722 = vpop.f32.mrb[0].mxu0
        %v723 = vadd.f32 0.0, %v722
        %724 = vmatprep.mubr.f32.mxu0 0.0
        %725 = vmatmul.mubr.f32.gmra.mrb[0].mxu0 %v572
        %v726 = vpop.f32.mrb[0].mxu0
        %v727 = vadd.f32 0.0, %v726
        %v728 = vpop.f32.mrb[0].mxu0
        %v729 = vadd.f32 0.0, %v728
        %730 = vmatprep.mubr.f32.mxu0 0.0
        %731 = vmatmul.mubr.f32.gmra.mrb[0].mxu0 %v577
        %v732 = vpop.f32.mrb[0].mxu0
        %v733 = vadd.f32 0.0, %v732
        %v734 = vpop.f32.mrb[0].mxu0
        %v735 = vadd.f32 0.0, %v734
        %736 = vmatprep.mubr.f32.mxu0 0.0
        %737 = vmatmul.mubr.f32.gmra.mrb[0].mxu0 %v582
        %v738 = vpop.f32.mrb[0].mxu0
        %v739 = vadd.f32 0.0, %v738
        %v740 = vpop.f32.mrb[0].mxu0
        %v741 = vadd.f32 0.0, %v740
        %742 = vmatprep.mubr.f32.mxu0 0.0
        %743 = vmatmul.mubr.f32.gmra.mrb[0].mxu0 %v587
        %v744 = vpop.f32.mrb[0].mxu0
        %v745 = vadd.f32 0.0, %v744
        %v746 = vpop.f32.mrb[0].mxu0
        %v747 = vadd.f32 0.0, %v746
        %748 = vmatprep.mubr.f32.mxu0 0.0
        %749 = vmatmul.mubr.f32.gmra.mrb[0].mxu0 %v592
        %v750 = vpop.f32.mrb[0].mxu0
        %v751 = vadd.f32 0.0, %v750
        %v752 = vpop.f32.mrb[0].mxu0
        %v753 = vadd.f32 0.0, %v752
        %754 = vmatprep.mubr.f32.mxu0 0.0
        %755 = vmatmul.mubr.f32.gmra.mrb[0].mxu0 %v597
        %v756 = vpop.f32.mrb[0].mxu0
        %v757 = vadd.f32 0.0, %v756
        %v758 = vpop.f32.mrb[0].mxu0
        %v759 = vadd.f32 0.0, %v758
        %760 = vdwg.mxu0
        %v761 = vmax.f32 %v667, %v669
        %762 = vmax.xlane.f32.xlu0 %v761
        %v763 = vpop.xlane.xlu0 %762
        %v764 = vmax.f32 %v673, %v675
        %765 = vmax.xlane.f32.xlu0 %v764
        %v766 = vpop.xlane.xlu0 %765
        %v767 = vmax.f32 %v679, %v681
        %768 = vmax.xlane.f32.xlu0 %v767
        %v769 = vpop.xlane.xlu0 %768
        %v770 = vmax.f32 %v685, %v687
        %771 = vmax.xlane.f32.xlu0 %v770
        %v772 = vpop.xlane.xlu0 %771
        %v773 = vmax.f32 %v691, %v693
        %774 = vmax.xlane.f32.xlu0 %v773
        %v775 = vpop.xlane.xlu0 %774
        %v776 = vmax.f32 %v697, %v699
        %777 = vmax.xlane.f32.xlu0 %v776
        %v778 = vpop.xlane.xlu0 %777
        %v779 = vmax.f32 %v703, %v705
        %780 = vmax.xlane.f32.xlu0 %v779
        %v781 = vpop.xlane.xlu0 %780
        %v782 = vmax.f32 %v709, %v711
        %783 = vmax.xlane.f32.xlu0 %v782
        %v784 = vpop.xlane.xlu0 %783
        %v785 = vmax.f32 %v715, %v717
        %786 = vmax.xlane.f32.xlu0 %v785
        %v787 = vpop.xlane.xlu0 %786
        %v788 = vmax.f32 %v721, %v723
        %789 = vmax.xlane.f32.xlu0 %v788
        %v790 = vpop.xlane.xlu0 %789
        %v791 = vmax.f32 %v727, %v729
        %792 = vmax.xlane.f32.xlu0 %v791
        %v793 = vpop.xlane.xlu0 %792
        %v794 = vmax.f32 %v733, %v735
        %795 = vmax.xlane.f32.xlu0 %v794
        %v796 = vpop.xlane.xlu0 %795
        %v797 = vmax.f32 %v739, %v741
        %798 = vmax.xlane.f32.xlu0 %v797
        %v799 = vpop.xlane.xlu0 %798
        %v800 = vmax.f32 %v745, %v747
        %801 = vmax.xlane.f32.xlu0 %v800
        %v802 = vpop.xlane.xlu0 %801
        %v803 = vmax.f32 %v751, %v753
        %804 = vmax.xlane.f32.xlu0 %v803
        %v805 = vpop.xlane.xlu0 %804
        %v806 = vmax.f32 %v757, %v759
        %807 = vmax.xlane.f32.xlu0 %v806
        %v808 = vpop.xlane.xlu0 %807
        %v809 = vsub.f32 %v667, %v763
        %v810 = vsub.f32 %v669, %v763
        %v811 = vsub.f32 %v673, %v766
        %v812 = vsub.f32 %v675, %v766
        %v813 = vsub.f32 %v679, %v769
        %v814 = vsub.f32 %v681, %v769
        %v815 = vsub.f32 %v685, %v772
        %v816 = vsub.f32 %v687, %v772
        %v817 = vsub.f32 %v691, %v775
        %v818 = vsub.f32 %v693, %v775
        %v819 = vsub.f32 %v697, %v778
        %v820 = vsub.f32 %v699, %v778
        %v821 = vsub.f32 %v703, %v781
        %v822 = vsub.f32 %v705, %v781
        %v823 = vsub.f32 %v709, %v784
        %v824 = vsub.f32 %v711, %v784
        %v825 = vsub.f32 %v715, %v787
        %v826 = vsub.f32 %v717, %v787
        %v827 = vsub.f32 %v721, %v790
        %v828 = vsub.f32 %v723, %v790
        %v829 = vsub.f32 %v727, %v793
        %v830 = vsub.f32 %v729, %v793
        %v831 = vsub.f32 %v733, %v796
        %v832 = vsub.f32 %v735, %v796
        %v833 = vsub.f32 %v739, %v799
        %v834 = vsub.f32 %v741, %v799
        %v835 = vsub.f32 %v745, %v802
        %v836 = vsub.f32 %v747, %v802
        %v837 = vsub.f32 %v751, %v805
        %v838 = vsub.f32 %v753, %v805
        %v839 = vsub.f32 %v757, %v808
        %v840 = vsub.f32 %v759, %v808
        %v841 = vmul.f32 %v809, 1.442695
        %v842 = vpow.pop %v841
        %v843 = vmul.f32 %v810, 1.442695
        %v844 = vpow.pop %v843
        %v845 = vmul.f32 %v811, 1.442695
        %v846 = vpow.pop %v845
        %v847 = vmul.f32 %v812, 1.442695
        %v848 = vpow.pop %v847
        %v849 = vmul.f32 %v813, 1.442695
        %v850 = vpow.pop %v849
        %v851 = vmul.f32 %v814, 1.442695
        %v852 = vpow.pop %v851
        %v853 = vmul.f32 %v815, 1.442695
        %v854 = vpow.pop %v853
        %v855 = vmul.f32 %v816, 1.442695
        %v856 = vpow.pop %v855
        %v857 = vmul.f32 %v817, 1.442695
        %v858 = vpow.pop %v857
        %v859 = vmul.f32 %v818, 1.442695
        %v860 = vpow.pop %v859
        %v861 = vmul.f32 %v819, 1.442695
        %v862 = vpow.pop %v861
        %v863 = vmul.f32 %v820, 1.442695
        %v864 = vpow.pop %v863
        %v865 = vmul.f32 %v821, 1.442695
        %v866 = vpow.pop %v865
        %v867 = vmul.f32 %v822, 1.442695
        %v868 = vpow.pop %v867
        %v869 = vmul.f32 %v823, 1.442695
        %v870 = vpow.pop %v869
        %v871 = vmul.f32 %v824, 1.442695
        %v872 = vpow.pop %v871
        %v873 = vmul.f32 %v825, 1.442695
        %v874 = vpow.pop %v873
        %v875 = vmul.f32 %v826, 1.442695
        %v876 = vpow.pop %v875
        %v877 = vmul.f32 %v827, 1.442695
        %v878 = vpow.pop %v877
        %v879 = vmul.f32 %v828, 1.442695
        %v880 = vpow.pop %v879
        %v881 = vmul.f32 %v829, 1.442695
        %v882 = vpow.pop %v881
        %v883 = vmul.f32 %v830, 1.442695
        %v884 = vpow.pop %v883
        %v885 = vmul.f32 %v831, 1.442695
        %v886 = vpow.pop %v885
        %v887 = vmul.f32 %v832, 1.442695
        %v888 = vpow.pop %v887
        %v889 = vmul.f32 %v833, 1.442695
        %v890 = vpow.pop %v889
        %v891 = vmul.f32 %v834, 1.442695
        %v892 = vpow.pop %v891
        %v893 = vmul.f32 %v835, 1.442695
        %v894 = vpow.pop %v893
        %v895 = vmul.f32 %v836, 1.442695
        %v896 = vpow.pop %v895
        %v897 = vmul.f32 %v837, 1.442695
        %v898 = vpow.pop %v897
        %v899 = vmul.f32 %v838, 1.442695
        %v900 = vpow.pop %v899
        %v901 = vmul.f32 %v839, 1.442695
        %v902 = vpow.pop %v901
        %v903 = vmul.f32 %v840, 1.442695
        %v904 = vpow.pop %v903
        %905 = vmatprep.subr.mxu0 %v844
        %906 = vmatpush1.xpose.msra.mxu0 %v842
        %907 = vmatprep.subr.mxu0 %v848
        %908 = vmatpush1.xpose.msra.mxu0 %v846
        %909 = vmatprep.subr.mxu0 %v852
        %910 = vmatpush1.xpose.msra.mxu0 %v850
        %911 = vmatprep.subr.mxu0 %v856
        %912 = vmatpush1.xpose.msra.mxu0 %v854
        %913 = vmatprep.subr.mxu0 %v860
        %914 = vmatpush1.xpose.msra.mxu0 %v858
        %915 = vmatprep.subr.mxu0 %v864
        %916 = vmatpush1.xpose.msra.mxu0 %v862
        %917 = vmatprep.subr.mxu0 %v868
        %918 = vmatpush1.xpose.msra.mxu0 %v866
        %919 = vmatprep.subr.mxu0 %v872
        %920 = vmatpush1.xpose.msra.mxu0 %v870
        %921 = vmatprep.subr.mxu0 %v876
        %922 = vmatpush1.xpose.msra.mxu0 %v874
        %923 = vmatprep.subr.mxu0 %v880
        %924 = vmatpush1.xpose.msra.mxu0 %v878
        %925 = vmatprep.subr.mxu0 %v884
        %926 = vmatpush1.xpose.msra.mxu0 %v882
        %927 = vmatprep.subr.mxu0 %v888
        %928 = vmatpush1.xpose.msra.mxu0 %v886
        %929 = vmatprep.subr.mxu0 %v892
        %930 = vmatpush1.xpose.msra.mxu0 %v890
        %931 = vmatprep.subr.mxu0 %v896
        %932 = vmatpush1.xpose.msra.mxu0 %v894
        %933 = vmatprep.subr.mxu0 %v900
        %934 = vmatpush1.xpose.msra.mxu0 %v898
        %935 = vmatprep.subr.mxu0 %v904
        %936 = vmatpush1.xpose.msra.mxu0 %v902
        %937 = vmatprep.subr.mxu0 0.0
        %938 = vmatpush1.xpose.msra.mxu0 0.0
        %939 = vmatprep.subr.mxu0 0.0
        %940 = vmatpush1.xpose.msra.mxu0 0.0
        %941 = vmatprep.subr.mxu0 0.0
        %942 = vmatpush1.xpose.msra.mxu0 0.0
        %943 = vmatprep.subr.mxu0 0.0
        %944 = vmatpush1.xpose.msra.mxu0 0.0
        %945 = vmatprep.subr.mxu0 0.0
        %946 = vmatpush1.xpose.msra.mxu0 0.0
        %947 = vmatprep.subr.mxu0 0.0
        %948 = vmatpush1.xpose.msra.mxu0 0.0
        %949 = vmatprep.subr.mxu0 0.0
        %950 = vmatpush1.xpose.msra.mxu0 0.0
        %951 = vmatprep.subr.mxu0 0.0
        %952 = vmatpush1.xpose.msra.mxu0 0.0
        %953 = vmatprep.subr.mxu0 0.0
        %954 = vmatpush1.xpose.msra.mxu0 0.0
        %955 = vmatprep.subr.mxu0 0.0
        %956 = vmatpush1.xpose.msra.mxu0 0.0
        %957 = vmatprep.subr.mxu0 0.0
        %958 = vmatpush1.xpose.msra.mxu0 0.0
        %959 = vmatprep.subr.mxu0 0.0
        %960 = vmatpush1.xpose.msra.mxu0 0.0
        %961 = vmatprep.subr.mxu0 0.0
        %962 = vmatpush1.xpose.msra.mxu0 0.0
        %963 = vmatprep.subr.mxu0 0.0
        %964 = vmatpush1.xpose.msra.mxu0 0.0
        %965 = vmatprep.subr.mxu0 0.0
        %966 = vmatpush1.xpose.msra.mxu0 0.0
        %967 = vmatprep.subr.mxu0 0.0
        %968 = vmatpush1.xpose.msra.mxu0 0.0
        %969 = vmatprep.mubr.f32.mxu0 1.0
        %970 = vmatmul.mubr.f32.gmra.mrb[0].mxu0 1.0
        %v971 = vpop.f32.mrb[0].mxu0
        %v972 = vadd.f32 0.0, %v971
        %v973 = vpop.f32.mrb[0].mxu0
        %974 = vdwg.mxu0
        %v975 = vrcp.pop %v972
        %976 = vmatprep.subr.mxu0 %v844
        %977 = vmatpush1.xpose.msra.mxu0 %v842
        %978 = vmatprep.subr.mxu0 %v848
        %979 = vmatpush1.xpose.msra.mxu0 %v846
        %980 = vmatprep.subr.mxu0 %v852
        %981 = vmatpush1.xpose.msra.mxu0 %v850
        %982 = vmatprep.subr.mxu0 %v856
        %983 = vmatpush1.xpose.msra.mxu0 %v854
        %984 = vmatprep.subr.mxu0 %v860
        %985 = vmatpush1.xpose.msra.mxu0 %v858
        %986 = vmatprep.subr.mxu0 %v864
        %987 = vmatpush1.xpose.msra.mxu0 %v862
        %988 = vmatprep.subr.mxu0 %v868
        %989 = vmatpush1.xpose.msra.mxu0 %v866
        %990 = vmatprep.subr.mxu0 %v872
        %991 = vmatpush1.xpose.msra.mxu0 %v870
        %992 = vmatprep.subr.mxu0 %v876
        %993 = vmatpush1.xpose.msra.mxu0 %v874
        %994 = vmatprep.subr.mxu0 %v880
        %995 = vmatpush1.xpose.msra.mxu0 %v878
        %996 = vmatprep.subr.mxu0 %v884
        %997 = vmatpush1.xpose.msra.mxu0 %v882
        %998 = vmatprep.subr.mxu0 %v888
        %999 = vmatpush1.xpose.msra.mxu0 %v886
        %1000 = vmatprep.subr.mxu0 %v892
        %1001 = vmatpush1.xpose.msra.mxu0 %v890
        %1002 = vmatprep.subr.mxu0 %v896
        %1003 = vmatpush1.xpose.msra.mxu0 %v894
        %1004 = vmatprep.subr.mxu0 %v900
        %1005 = vmatpush1.xpose.msra.mxu0 %v898
        %1006 = vmatprep.subr.mxu0 %v904
        %1007 = vmatpush1.xpose.msra.mxu0 %v902
        %1008 = vmatprep.subr.mxu0 0.0
        %1009 = vmatpush1.xpose.msra.mxu0 0.0
        %1010 = vmatprep.subr.mxu0 0.0
        %1011 = vmatpush1.xpose.msra.mxu0 0.0
        %1012 = vmatprep.subr.mxu0 0.0
        %1013 = vmatpush1.xpose.msra.mxu0 0.0
        %1014 = vmatprep.subr.mxu0 0.0
        %1015 = vmatpush1.xpose.msra.mxu0 0.0
        %1016 = vmatprep.subr.mxu0 0.0
        %1017 = vmatpush1.xpose.msra.mxu0 0.0
        %1018 = vmatprep.subr.mxu0 0.0
        %1019 = vmatpush1.xpose.msra.mxu0 0.0
        %1020 = vmatprep.subr.mxu0 0.0
        %1021 = vmatpush1.xpose.msra.mxu0 0.0
        %1022 = vmatprep.subr.mxu0 0.0
        %1023 = vmatpush1.xpose.msra.mxu0 0.0
        %1024 = vmatprep.subr.mxu0 0.0
        %1025 = vmatpush1.xpose.msra.mxu0 0.0
        %1026 = vmatprep.subr.mxu0 0.0
        %1027 = vmatpush1.xpose.msra.mxu0 0.0
        %1028 = vmatprep.subr.mxu0 0.0
        %1029 = vmatpush1.xpose.msra.mxu0 0.0
        %1030 = vmatprep.subr.mxu0 0.0
        %1031 = vmatpush1.xpose.msra.mxu0 0.0
        %1032 = vmatprep.subr.mxu0 0.0
        %1033 = vmatpush1.xpose.msra.mxu0 0.0
        %1034 = vmatprep.subr.mxu0 0.0
        %1035 = vmatpush1.xpose.msra.mxu0 0.0
        %1036 = vmatprep.subr.mxu0 0.0
        %1037 = vmatpush1.xpose.msra.mxu0 0.0
        %1038 = vmatprep.subr.mxu0 0.0
        %1039 = vmatpush1.xpose.msra.mxu0 0.0
        %1040 = vmatprep.mubr.f32.mxu0 %v330
        %1041 = vmatmul.mubr.f32.gmra.mrb[0].mxu0 %v329
        %v1042 = vpop.f32.mrb[0].mxu0
        %v1043 = vadd.f32 0.0, %v1042
        %v1044 = vpop.f32.mrb[0].mxu0
        %1045 = vmatprep.mubr.f32.mxu0 %v332
        %1046 = vmatmul.mubr.f32.gmra.mrb[0].mxu0 %v331
        %v1047 = vpop.f32.mrb[0].mxu0
        %v1048 = vadd.f32 0.0, %v1047
        %v1049 = vpop.f32.mrb[0].mxu0
        %1050 = vmatprep.mubr.f32.mxu0 %v334
        %1051 = vmatmul.mubr.f32.gmra.mrb[0].mxu0 %v333
        %v1052 = vpop.f32.mrb[0].mxu0
        %v1053 = vadd.f32 0.0, %v1052
        %v1054 = vpop.f32.mrb[0].mxu0
        %1055 = vmatprep.mubr.f32.mxu0 %v336
        %1056 = vmatmul.mubr.f32.gmra.mrb[0].mxu0 %v335
        %v1057 = vpop.f32.mrb[0].mxu0
        %v1058 = vadd.f32 0.0, %v1057
        %v1059 = vpop.f32.mrb[0].mxu0
        %1060 = vmatprep.mubr.f32.mxu0 %v338
        %1061 = vmatmul.mubr.f32.gmra.mrb[0].mxu0 %v337
        %v1062 = vpop.f32.mrb[0].mxu0
        %v1063 = vadd.f32 0.0, %v1062
        %v1064 = vpop.f32.mrb[0].mxu0
        %1065 = vmatprep.mubr.f32.mxu0 %v340
        %1066 = vmatmul.mubr.f32.gmra.mrb[0].mxu0 %v339
        %v1067 = vpop.f32.mrb[0].mxu0
        %v1068 = vadd.f32 0.0, %v1067
        %v1069 = vpop.f32.mrb[0].mxu0
        %1070 = vmatprep.mubr.f32.mxu0 %v342
        %1071 = vmatmul.mubr.f32.gmra.mrb[0].mxu0 %v341
        %v1072 = vpop.f32.mrb[0].mxu0
        %v1073 = vadd.f32 0.0, %v1072
        %v1074 = vpop.f32.mrb[0].mxu0
        %1075 = vmatprep.mubr.f32.mxu0 %v344
        %1076 = vmatmul.mubr.f32.gmra.mrb[0].mxu0 %v343
        %v1077 = vpop.f32.mrb[0].mxu0
        %v1078 = vadd.f32 0.0, %v1077
        %v1079 = vpop.f32.mrb[0].mxu0
        %1080 = vmatprep.mubr.f32.mxu0 %v346
        %1081 = vmatmul.mubr.f32.gmra.mrb[0].mxu0 %v345
        %v1082 = vpop.f32.mrb[0].mxu0
        %v1083 = vadd.f32 0.0, %v1082
        %v1084 = vpop.f32.mrb[0].mxu0
        %1085 = vmatprep.mubr.f32.mxu0 %v348
        %1086 = vmatmul.mubr.f32.gmra.mrb[0].mxu0 %v347
        %v1087 = vpop.f32.mrb[0].mxu0
        %v1088 = vadd.f32 0.0, %v1087
        %v1089 = vpop.f32.mrb[0].mxu0
        %1090 = vmatprep.mubr.f32.mxu0 %v350
        %1091 = vmatmul.mubr.f32.gmra.mrb[0].mxu0 %v349
        %v1092 = vpop.f32.mrb[0].mxu0
        %v1093 = vadd.f32 0.0, %v1092
        %v1094 = vpop.f32.mrb[0].mxu0
        %1095 = vmatprep.mubr.f32.mxu0 %v352
        %1096 = vmatmul.mubr.f32.gmra.mrb[0].mxu0 %v351
        %v1097 = vpop.f32.mrb[0].mxu0
        %v1098 = vadd.f32 0.0, %v1097
        %v1099 = vpop.f32.mrb[0].mxu0
        %1100 = vmatprep.mubr.f32.mxu0 %v354
        %1101 = vmatmul.mubr.f32.gmra.mrb[0].mxu0 %v353
        %v1102 = vpop.f32.mrb[0].mxu0
        %v1103 = vadd.f32 0.0, %v1102
        %v1104 = vpop.f32.mrb[0].mxu0
        %1105 = vmatprep.mubr.f32.mxu0 %v356
        %1106 = vmatmul.mubr.f32.gmra.mrb[0].mxu0 %v355
        %v1107 = vpop.f32.mrb[0].mxu0
        %v1108 = vadd.f32 0.0, %v1107
        %v1109 = vpop.f32.mrb[0].mxu0
        %1110 = vmatprep.mubr.f32.mxu0 %v358
        %1111 = vmatmul.mubr.f32.gmra.mrb[0].mxu0 %v357
        %v1112 = vpop.f32.mrb[0].mxu0
        %v1113 = vadd.f32 0.0, %v1112
        %v1114 = vpop.f32.mrb[0].mxu0
        %1115 = vmatprep.mubr.f32.mxu0 %v360
        %1116 = vmatmul.mubr.f32.gmra.mrb[0].mxu0 %v359
        %v1117 = vpop.f32.mrb[0].mxu0
        %v1118 = vadd.f32 0.0, %v1117
        %v1119 = vpop.f32.mrb[0].mxu0
        %1120 = vdwg.mxu0
        %v1121 = vlaneseq
        %v1122 = vshrl.u32 %v1121, 7
        %v1123 = vsub.s32 0, %v1122
        %v1124 = vrot.slane %v975, %v1123
        %v1125 = vmul.f32 %v1043, %v1124
        %v1126 = vmul.f32 %v1048, %v1124
        %v1127 = vmul.f32 %v1053, %v1124
        %v1128 = vmul.f32 %v1058, %v1124
        %v1129 = vmul.f32 %v1063, %v1124
        %v1130 = vmul.f32 %v1068, %v1124
        %v1131 = vmul.f32 %v1073, %v1124
        %v1132 = vmul.f32 %v1078, %v1124
        %v1133 = vmul.f32 %v1083, %v1124
        %v1134 = vmul.f32 %v1088, %v1124
        %v1135 = vmul.f32 %v1093, %v1124
        %v1136 = vmul.f32 %v1098, %v1124
        %v1137 = vmul.f32 %v1103, %v1124
        %v1138 = vmul.f32 %v1108, %v1124
        %v1139 = vmul.f32 %v1113, %v1124
        %v1140 = vmul.f32 %v1118, %v1124
        %v1141 = vld [vmem:[%s3] sm:$0xff]
        %v1142 = vld [vmem:[%s3 + $0x8] sm:$0xff]
        %v1143 = vld [vmem:[%s3 + $0x10] sm:$0xff]
        %v1144 = vld [vmem:[%s3 + $0x18] sm:$0xff]
        %v1145 = vld [vmem:[%s3 + $0x20] sm:$0xff]
        %v1146 = vld [vmem:[%s3 + $0x28] sm:$0xff]
        %v1147 = vld [vmem:[%s3 + $0x30] sm:$0xff]
        %v1148 = vld [vmem:[%s3 + $0x38] sm:$0xff]
        %v1149 = vld [vmem:[%s3 + $0x40] sm:$0xff]
        %v1150 = vld [vmem:[%s3 + $0x48] sm:$0xff]
        %v1151 = vld [vmem:[%s3 + $0x50] sm:$0xff]
        %v1152 = vld [vmem:[%s3 + $0x58] sm:$0xff]
        %v1153 = vld [vmem:[%s3 + $0x60] sm:$0xff]
        %v1154 = vld [vmem:[%s3 + $0x68] sm:$0xff]
        %v1155 = vld [vmem:[%s3 + $0x70] sm:$0xff]
        %v1156 = vld [vmem:[%s3 + $0x78] sm:$0xff]
        %v1157 = vld [vmem:[%s4] sm:$0xff]
        %v1158 = vld [vmem:[%s4 + $0x8] sm:$0xff]
        %v1159 = vld [vmem:[%s4 + $0x10] sm:$0xff]
        %v1160 = vld [vmem:[%s4 + $0x18] sm:$0xff]
        %v1161 = vld [vmem:[%s4 + $0x20] sm:$0xff]
        %v1162 = vld [vmem:[%s4 + $0x28] sm:$0xff]
        %v1163 = vld [vmem:[%s4 + $0x30] sm:$0xff]
        %v1164 = vld [vmem:[%s4 + $0x38] sm:$0xff]
        %v1165 = vld [vmem:[%s4 + $0x40] sm:$0xff]
        %v1166 = vld [vmem:[%s4 + $0x48] sm:$0xff]
        %v1167 = vld [vmem:[%s4 + $0x50] sm:$0xff]
        %v1168 = vld [vmem:[%s4 + $0x58] sm:$0xff]
        %v1169 = vld [vmem:[%s4 + $0x60] sm:$0xff]
        %v1170 = vld [vmem:[%s4 + $0x68] sm:$0xff]
        %v1171 = vld [vmem:[%s4 + $0x70] sm:$0xff]
        %v1172 = vld [vmem:[%s4 + $0x78] sm:$0xff]
        %1174 = vset.pattern.permute.xlu0 0
        %1175 = vperm.xlu0 %1174, %v1157
        %v1176 = vpop.permute.xlu0 %1175
        %1179 = vset.pattern.permute.xlu0 0
        %1180 = vperm.xlu0 %1179, %v1158
        %v1181 = vpop.permute.xlu0 %1180
        %1184 = vset.pattern.permute.xlu0 0
        %1185 = vperm.xlu0 %1184, %v1159
        %v1186 = vpop.permute.xlu0 %1185
        %1189 = vset.pattern.permute.xlu0 0
        %1190 = vperm.xlu0 %1189, %v1160
        %v1191 = vpop.permute.xlu0 %1190
        %1194 = vset.pattern.permute.xlu0 0
        %1195 = vperm.xlu0 %1194, %v1161
        %v1196 = vpop.permute.xlu0 %1195
        %1199 = vset.pattern.permute.xlu0 0
        %1200 = vperm.xlu0 %1199, %v1162
        %v1201 = vpop.permute.xlu0 %1200
        %1204 = vset.pattern.permute.xlu0 0
        %1205 = vperm.xlu0 %1204, %v1163
        %v1206 = vpop.permute.xlu0 %1205
        %1209 = vset.pattern.permute.xlu0 0
        %1210 = vperm.xlu0 %1209, %v1164
        %v1211 = vpop.permute.xlu0 %1210
        %1214 = vset.pattern.permute.xlu0 0
        %1215 = vperm.xlu0 %1214, %v1165
        %v1216 = vpop.permute.xlu0 %1215
        %1219 = vset.pattern.permute.xlu0 0
        %1220 = vperm.xlu0 %1219, %v1166
        %v1221 = vpop.permute.xlu0 %1220
        %1224 = vset.pattern.permute.xlu0 0
        %1225 = vperm.xlu0 %1224, %v1167
        %v1226 = vpop.permute.xlu0 %1225
        %1229 = vset.pattern.permute.xlu0 0
        %1230 = vperm.xlu0 %1229, %v1168
        %v1231 = vpop.permute.xlu0 %1230
        %1234 = vset.pattern.permute.xlu0 0
        %1235 = vperm.xlu0 %1234, %v1169
        %v1236 = vpop.permute.xlu0 %1235
        %1239 = vset.pattern.permute.xlu0 0
        %1240 = vperm.xlu0 %1239, %v1170
        %v1241 = vpop.permute.xlu0 %1240
        %1244 = vset.pattern.permute.xlu0 0
        %1245 = vperm.xlu0 %1244, %v1171
        %v1246 = vpop.permute.xlu0 %1245
        %1249 = vset.pattern.permute.xlu0 0
        %1250 = vperm.xlu0 %1249, %v1172
        %v1251 = vpop.permute.xlu0 %1250
        %1253 = vmatprep.subr.mxu0 0.0
        %1254 = vmatpush1.msra.mxu0 %v1125
        %1255 = vmatprep.subr.mxu0 0.0
        %1256 = vmatpush1.msra.mxu0 %v1126
        %1257 = vmatprep.subr.mxu0 0.0
        %1258 = vmatpush1.msra.mxu0 %v1127
        %1259 = vmatprep.subr.mxu0 0.0
        %1260 = vmatpush1.msra.mxu0 %v1128
        %1261 = vmatprep.subr.mxu0 0.0
        %1262 = vmatpush1.msra.mxu0 %v1129
        %1263 = vmatprep.subr.mxu0 0.0
        %1264 = vmatpush1.msra.mxu0 %v1130
        %1265 = vmatprep.subr.mxu0 0.0
        %1266 = vmatpush1.msra.mxu0 %v1131
        %1267 = vmatprep.subr.mxu0 0.0
        %1268 = vmatpush1.msra.mxu0 %v1132
        %1269 = vmatprep.subr.mxu0 0.0
        %1270 = vmatpush1.msra.mxu0 %v1133
        %1271 = vmatprep.subr.mxu0 0.0
        %1272 = vmatpush1.msra.mxu0 %v1134
        %1273 = vmatprep.subr.mxu0 0.0
        %1274 = vmatpush1.msra.mxu0 %v1135
        %1275 = vmatprep.subr.mxu0 0.0
        %1276 = vmatpush1.msra.mxu0 %v1136
        %1277 = vmatprep.subr.mxu0 0.0
        %1278 = vmatpush1.msra.mxu0 %v1137
        %1279 = vmatprep.subr.mxu0 0.0
        %1280 = vmatpush1.msra.mxu0 %v1138
        %1281 = vmatprep.subr.mxu0 0.0
        %1282 = vmatpush1.msra.mxu0 %v1139
        %1283 = vmatprep.subr.mxu0 0.0
        %1284 = vmatpush1.msra.mxu0 %v1140
        %1285 = vmatprep.subr.mxu0 0.0
        %1286 = vmatpush1.msra.mxu0 0.0
        %1287 = vmatprep.subr.mxu0 0.0
        %1288 = vmatpush1.msra.mxu0 0.0
        %1289 = vmatprep.subr.mxu0 0.0
        %1290 = vmatpush1.msra.mxu0 0.0
        %1291 = vmatprep.subr.mxu0 0.0
        %1292 = vmatpush1.msra.mxu0 0.0
        %1293 = vmatprep.subr.mxu0 0.0
        %1294 = vmatpush1.msra.mxu0 0.0
        %1295 = vmatprep.subr.mxu0 0.0
        %1296 = vmatpush1.msra.mxu0 0.0
        %1297 = vmatprep.subr.mxu0 0.0
        %1298 = vmatpush1.msra.mxu0 0.0
        %1299 = vmatprep.subr.mxu0 0.0
        %1300 = vmatpush1.msra.mxu0 0.0
        %1301 = vmatprep.subr.mxu0 0.0
        %1302 = vmatpush1.msra.mxu0 0.0
        %1303 = vmatprep.subr.mxu0 0.0
        %1304 = vmatpush1.msra.mxu0 0.0
        %1305 = vmatprep.subr.mxu0 0.0
        %1306 = vmatpush1.msra.mxu0 0.0
        %1307 = vmatprep.subr.mxu0 0.0
        %1308 = vmatpush1.msra.mxu0 0.0
        %1309 = vmatprep.subr.mxu0 0.0
        %1310 = vmatpush1.msra.mxu0 0.0
        %1311 = vmatprep.subr.mxu0 0.0
        %1312 = vmatpush1.msra.mxu0 0.0
        %1313 = vmatprep.subr.mxu0 0.0
        %1314 = vmatpush1.msra.mxu0 0.0
        %1315 = vmatprep.subr.mxu0 0.0
        %1316 = vmatpush1.msra.mxu0 0.0
        %1317 = vmatprep.mubr.f32.mxu0 0.0
        %1318 = vmatmul.mubr.f32.gmra.mrb[0].mxu0 %v1141
        %v1319 = vpop.f32.mrb[0].mxu0
        %v1320 = vadd.f32 %v1176, %v1319
        %v1321 = vpop.f32.mrb[0].mxu0
        %1322 = vmatprep.mubr.f32.mxu0 0.0
        %1323 = vmatmul.mubr.f32.gmra.mrb[0].mxu0 %v1142
        %v1324 = vpop.f32.mrb[0].mxu0
        %v1325 = vadd.f32 %v1181, %v1324
        %v1326 = vpop.f32.mrb[0].mxu0
        %1327 = vmatprep.mubr.f32.mxu0 0.0
        %1328 = vmatmul.mubr.f32.gmra.mrb[0].mxu0 %v1143
        %v1329 = vpop.f32.mrb[0].mxu0
        %v1330 = vadd.f32 %v1186, %v1329
        %v1331 = vpop.f32.mrb[0].mxu0
        %1332 = vmatprep.mubr.f32.mxu0 0.0
        %1333 = vmatmul.mubr.f32.gmra.mrb[0].mxu0 %v1144
        %v1334 = vpop.f32.mrb[0].mxu0
        %v1335 = vadd.f32 %v1191, %v1334
        %v1336 = vpop.f32.mrb[0].mxu0
        %1337 = vmatprep.mubr.f32.mxu0 0.0
        %1338 = vmatmul.mubr.f32.gmra.mrb[0].mxu0 %v1145
        %v1339 = vpop.f32.mrb[0].mxu0
        %v1340 = vadd.f32 %v1196, %v1339
        %v1341 = vpop.f32.mrb[0].mxu0
        %1342 = vmatprep.mubr.f32.mxu0 0.0
        %1343 = vmatmul.mubr.f32.gmra.mrb[0].mxu0 %v1146
        %v1344 = vpop.f32.mrb[0].mxu0
        %v1345 = vadd.f32 %v1201, %v1344
        %v1346 = vpop.f32.mrb[0].mxu0
        %1347 = vmatprep.mubr.f32.mxu0 0.0
        %1348 = vmatmul.mubr.f32.gmra.mrb[0].mxu0 %v1147
        %v1349 = vpop.f32.mrb[0].mxu0
        %v1350 = vadd.f32 %v1206, %v1349
        %v1351 = vpop.f32.mrb[0].mxu0
        %1352 = vmatprep.mubr.f32.mxu0 0.0
        %1353 = vmatmul.mubr.f32.gmra.mrb[0].mxu0 %v1148
        %v1354 = vpop.f32.mrb[0].mxu0
        %v1355 = vadd.f32 %v1211, %v1354
        %v1356 = vpop.f32.mrb[0].mxu0
        %1357 = vmatprep.mubr.f32.mxu0 0.0
        %1358 = vmatmul.mubr.f32.gmra.mrb[0].mxu0 %v1149
        %v1359 = vpop.f32.mrb[0].mxu0
        %v1360 = vadd.f32 %v1216, %v1359
        %v1361 = vpop.f32.mrb[0].mxu0
        %1362 = vmatprep.mubr.f32.mxu0 0.0
        %1363 = vmatmul.mubr.f32.gmra.mrb[0].mxu0 %v1150
        %v1364 = vpop.f32.mrb[0].mxu0
        %v1365 = vadd.f32 %v1221, %v1364
        %v1366 = vpop.f32.mrb[0].mxu0
        %1367 = vmatprep.mubr.f32.mxu0 0.0
        %1368 = vmatmul.mubr.f32.gmra.mrb[0].mxu0 %v1151
        %v1369 = vpop.f32.mrb[0].mxu0
        %v1370 = vadd.f32 %v1226, %v1369
        %v1371 = vpop.f32.mrb[0].mxu0
        %1372 = vmatprep.mubr.f32.mxu0 0.0
        %1373 = vmatmul.mubr.f32.gmra.mrb[0].mxu0 %v1152
        %v1374 = vpop.f32.mrb[0].mxu0
        %v1375 = vadd.f32 %v1231, %v1374
        %v1376 = vpop.f32.mrb[0].mxu0
        %1377 = vmatprep.mubr.f32.mxu0 0.0
        %1378 = vmatmul.mubr.f32.gmra.mrb[0].mxu0 %v1153
        %v1379 = vpop.f32.mrb[0].mxu0
        %v1380 = vadd.f32 %v1236, %v1379
        %v1381 = vpop.f32.mrb[0].mxu0
        %1382 = vmatprep.mubr.f32.mxu0 0.0
        %1383 = vmatmul.mubr.f32.gmra.mrb[0].mxu0 %v1154
        %v1384 = vpop.f32.mrb[0].mxu0
        %v1385 = vadd.f32 %v1241, %v1384
        %v1386 = vpop.f32.mrb[0].mxu0
        %1387 = vmatprep.mubr.f32.mxu0 0.0
        %1388 = vmatmul.mubr.f32.gmra.mrb[0].mxu0 %v1155
        %v1389 = vpop.f32.mrb[0].mxu0
        %v1390 = vadd.f32 %v1246, %v1389
        %v1391 = vpop.f32.mrb[0].mxu0
        %1392 = vmatprep.mubr.f32.mxu0 0.0
        %1393 = vmatmul.mubr.f32.gmra.mrb[0].mxu0 %v1156
        %v1394 = vpop.f32.mrb[0].mxu0
        %v1395 = vadd.f32 %v1251, %v1394
        %v1396 = vpop.f32.mrb[0].mxu0
        %1397 = vdwg.mxu0
        %s1398 = sld [smem:[#allocation3]]
        %v1399 = vstv %s1398
        %v1400 = vmul.f32 %v1399, %v1320
        %v1401 = vmul.f32 %v1399, %v1325
        %v1402 = vmul.f32 %v1399, %v1330
        %v1403 = vmul.f32 %v1399, %v1335
        %v1404 = vmul.f32 %v1399, %v1340
        %v1405 = vmul.f32 %v1399, %v1345
        %v1406 = vmul.f32 %v1399, %v1350
        %v1407 = vmul.f32 %v1399, %v1355
        %v1408 = vmul.f32 %v1399, %v1360
        %v1409 = vmul.f32 %v1399, %v1365
        %v1410 = vmul.f32 %v1399, %v1370
        %v1411 = vmul.f32 %v1399, %v1375
        %v1412 = vmul.f32 %v1399, %v1380
        %v1413 = vmul.f32 %v1399, %v1385
        %v1414 = vmul.f32 %v1399, %v1390
        %v1415 = vmul.f32 %v1399, %v1395
        %v1416 = vadd.f32 %v1400, %v384
        %v1417 = vadd.f32 %v1401, %v385
        %v1418 = vadd.f32 %v1402, %v386
        %v1419 = vadd.f32 %v1403, %v387
        %v1420 = vadd.f32 %v1404, %v388
        %v1421 = vadd.f32 %v1405, %v389
        %v1422 = vadd.f32 %v1406, %v390
        %v1423 = vadd.f32 %v1407, %v391
        %v1424 = vadd.f32 %v1408, %v392
        %v1425 = vadd.f32 %v1409, %v393
        %v1426 = vadd.f32 %v1410, %v394
        %v1427 = vadd.f32 %v1411, %v395
        %v1428 = vadd.f32 %v1412, %v396
        %v1429 = vadd.f32 %v1413, %v397
        %v1430 = vadd.f32 %v1414, %v398
        %v1431 = vadd.f32 %v1415, %v399
        %1432 = vst [vmem:[%s255] sm:$0xff] %v1416
        %1433 = vst [vmem:[%s255 + $0x8] sm:$0xff] %v1417
        %1434 = vst [vmem:[%s255 + $0x10] sm:$0xff] %v1418
        %1435 = vst [vmem:[%s255 + $0x18] sm:$0xff] %v1419
        %1436 = vst [vmem:[%s255 + $0x20] sm:$0xff] %v1420
        %1437 = vst [vmem:[%s255 + $0x28] sm:$0xff] %v1421
        %1438 = vst [vmem:[%s255 + $0x30] sm:$0xff] %v1422
        %1439 = vst [vmem:[%s255 + $0x38] sm:$0xff] %v1423
        %1440 = vst [vmem:[%s255 + $0x40] sm:$0xff] %v1424
        %1441 = vst [vmem:[%s255 + $0x48] sm:$0xff] %v1425
        %1442 = vst [vmem:[%s255 + $0x50] sm:$0xff] %v1426
        %1443 = vst [vmem:[%s255 + $0x58] sm:$0xff] %v1427
        %1444 = vst [vmem:[%s255 + $0x60] sm:$0xff] %v1428
        %1445 = vst [vmem:[%s255 + $0x68] sm:$0xff] %v1429
        %1446 = vst [vmem:[%s255 + $0x70] sm:$0xff] %v1430
        %1447 = vst [vmem:[%s255 + $0x78] sm:$0xff] %v1431
        %s1448 = sand.u32 %s171, 1
        %s1449 = sand.u32 %s171, 1
        %s1450 = smul.addr %s1449, 128
        %s1451 = scalar_lea.vmem [#allocation4], %s1450
        // Predicated region
        $region49: #{self_attention_nchw.1} parent=43 // pred_check
          %p1452 = pneg %p181
        $region50: #{self_attention_nchw.1} parent=43 // pred_check_branch
          %1454 = sbr.rel (%p1452) target = $region52
        $region51: #{self_attention_nchw.1} parent=43 // pred_region
          %s1455 = smul.addr %s22, 32
          %s1456 = sadd.s32 %s23, %s1455
          %s1457 = smul.addr %s1456, 8
          %s1458 = scalar_lea.vmem %s6, %s1457
          // Predicated region
          $region53: #{self_attention_nchw.1} parent=51 // pred_check
            _
          $region54: #{self_attention_nchw.1} parent=51 // pred_check_branch
            %1460 = sbr.rel (0) target = $region56
          $region55: #{self_attention_nchw.1} parent=51 // pred_region
            // Predicated region
            $region57: #{self_attention_nchw.1} parent=55 // pred_check
              _
            $region58: #{self_attention_nchw.1} parent=55 // pred_check_branch
              %1462 = sbr.rel (0) target = $region60
            $region59: #{self_attention_nchw.1} parent=55 // pred_region
              // Predicated region
              $region72: #{self_attention_nchw.1} parent=59 // pred_check
                _
              $region73: #{self_attention_nchw.1} parent=59 // pred_check_branch
                %1507 = sbr.rel (0) target = $region75
              $region74: #{self_attention_nchw.1} parent=59 // pred_region
                loop: start=0, step=1, limit=1
                $region76: #{self_attention_nchw.1} parent=74 // loop_pre_header
                  _
                $region77: #{self_attention_nchw.1} parent=74 // loop_header
                  %s1509 = sphi 0, %s1513
                  %p1510 = scmp.ge.s32.totalorder %s1509, 1
                  %s1514 = sphi %s1451, %s1451
                  %s1515 = sphi %s1458, %s1458
                $region78: #{self_attention_nchw.1} parent=74 // loop_header_branch
                  %1512 = sbr.rel (%p1510) target = $region82
                $region79: #{self_attention_nchw.1} parent=74 // loop_body
                  %v1516 = vld [vmem:[%s1514] sm:$0xff]
                  %1517 = vst [vmem:[%s1515] sm:$0xff] %v1516
                  %v1518 = vld [vmem:[%s1514 + $0x8] sm:$0xff]
                  %1519 = vst [vmem:[%s1515 + $0x10] sm:$0xff] %v1518
                  %v1520 = vld [vmem:[%s1514 + $0x10] sm:$0xff]
                  %1521 = vst [vmem:[%s1515 + $0x20] sm:$0xff] %v1520
                  %v1522 = vld [vmem:[%s1514 + $0x18] sm:$0xff]
                  %1523 = vst [vmem:[%s1515 + $0x30] sm:$0xff] %v1522
                  %v1524 = vld [vmem:[%s1514 + $0x20] sm:$0xff]
                  %1525 = vst [vmem:[%s1515 + $0x40] sm:$0xff] %v1524
                  %v1526 = vld [vmem:[%s1514 + $0x28] sm:$0xff]
                  %1527 = vst [vmem:[%s1515 + $0x50] sm:$0xff] %v1526
                  %v1528 = vld [vmem:[%s1514 + $0x30] sm:$0xff]
                  %1529 = vst [vmem:[%s1515 + $0x60] sm:$0xff] %v1528
                  %v1530 = vld [vmem:[%s1514 + $0x38] sm:$0xff]
                  %1531 = vst [vmem:[%s1515 + $0x70] sm:$0xff] %v1530
                  %v1532 = vld [vmem:[%s1514 + $0x40] sm:$0xff]
                  %1533 = vst [vmem:[%s1515 + $0x80] sm:$0xff] %v1532
                  %v1534 = vld [vmem:[%s1514 + $0x48] sm:$0xff]
                  %1535 = vst [vmem:[%s1515 + $0x90] sm:$0xff] %v1534
                  %v1536 = vld [vmem:[%s1514 + $0x50] sm:$0xff]
                  %1537 = vst [vmem:[%s1515 + $0xa0] sm:$0xff] %v1536
                  %v1538 = vld [vmem:[%s1514 + $0x58] sm:$0xff]
                  %1539 = vst [vmem:[%s1515 + $0xb0] sm:$0xff] %v1538
                  %v1540 = vld [vmem:[%s1514 + $0x60] sm:$0xff]
                  %1541 = vst [vmem:[%s1515 + $0xc0] sm:$0xff] %v1540
                  %v1542 = vld [vmem:[%s1514 + $0x68] sm:$0xff]
                  %1543 = vst [vmem:[%s1515 + $0xd0] sm:$0xff] %v1542
                  %v1544 = vld [vmem:[%s1514 + $0x70] sm:$0xff]
                  %1545 = vst [vmem:[%s1515 + $0xe0] sm:$0xff] %v1544
                  %v1546 = vld [vmem:[%s1514 + $0x78] sm:$0xff]
                  %1547 = vst [vmem:[%s1515 + $0xf0] sm:$0xff] %v1546
                $region80: #{self_attention_nchw.1} parent=74 // loop_footer
                  %s1513 = sadd.s32 1, %s1509
                $region81: #{self_attention_nchw.1} parent=74 // loop_footer_branch
                  %1508 = sbr.rel target = $region77
                $region82: #{self_attention_nchw.1} parent=74 // loop_exit
                  _
              $region75: #{self_attention_nchw.1} parent=59 // pred_fallthru
                _
              // Predicated region
              $region83: #{self_attention_nchw.1} parent=59 // pred_check
                _
              $region84: #{self_attention_nchw.1} parent=59 // pred_check_branch
                %1549 = sbr.rel target = $region86
              $region85: #{self_attention_nchw.1} parent=59 // pred_region
                _
              $region86: #{self_attention_nchw.1} parent=59 // pred_fallthru
                _
            $region60: #{self_attention_nchw.1} parent=55 // pred_fallthru
              _
            // Predicated region
            $region61: #{self_attention_nchw.1} parent=55 // pred_check
              _
            $region62: #{self_attention_nchw.1} parent=55 // pred_check_branch
              %1464 = sbr.rel target = $region64
            $region63: #{self_attention_nchw.1} parent=55 // pred_region
              loop: start=0, step=1, limit=1
              $region65: #{self_attention_nchw.1} parent=63 // loop_pre_header
                _
              $region66: #{self_attention_nchw.1} parent=63 // loop_header
                %s1467 = sphi 0, %s1471
                %p1468 = scmp.ge.s32.totalorder %s1467, 1
                %s1472 = sphi %s1451, %s1451
                %s1473 = sphi %s1458, %s1458
              $region67: #{self_attention_nchw.1} parent=63 // loop_header_branch
                %1470 = sbr.rel (%p1468) target = $region71
              $region68: #{self_attention_nchw.1} parent=63 // loop_body
                %v1474 = vld [vmem:[%s1472] sm:$0xff]
                %1475 = vst [vmem:[%s1473] sm:$0xff] %v1474
                %v1476 = vld [vmem:[%s1472 + $0x8] sm:$0xff]
                %1477 = vst [vmem:[%s1473 + $0x10] sm:$0xff] %v1476
                %v1478 = vld [vmem:[%s1472 + $0x10] sm:$0xff]
                %1479 = vst [vmem:[%s1473 + $0x20] sm:$0xff] %v1478
                %v1480 = vld [vmem:[%s1472 + $0x18] sm:$0xff]
                %1481 = vst [vmem:[%s1473 + $0x30] sm:$0xff] %v1480
                %v1482 = vld [vmem:[%s1472 + $0x20] sm:$0xff]
                %1483 = vst [vmem:[%s1473 + $0x40] sm:$0xff] %v1482
                %v1484 = vld [vmem:[%s1472 + $0x28] sm:$0xff]
                %1485 = vst [vmem:[%s1473 + $0x50] sm:$0xff] %v1484
                %v1486 = vld [vmem:[%s1472 + $0x30] sm:$0xff]
                %1487 = vst [vmem:[%s1473 + $0x60] sm:$0xff] %v1486
                %v1488 = vld [vmem:[%s1472 + $0x38] sm:$0xff]
                %1489 = vst [vmem:[%s1473 + $0x70] sm:$0xff] %v1488
                %v1490 = vld [vmem:[%s1472 + $0x40] sm:$0xff]
                %1491 = vst [vmem:[%s1473 + $0x80] sm:$0xff] %v1490
                %v1492 = vld [vmem:[%s1472 + $0x48] sm:$0xff]
                %1493 = vst [vmem:[%s1473 + $0x90] sm:$0xff] %v1492
                %v1494 = vld [vmem:[%s1472 + $0x50] sm:$0xff]
                %1495 = vst [vmem:[%s1473 + $0xa0] sm:$0xff] %v1494
                %v1496 = vld [vmem:[%s1472 + $0x58] sm:$0xff]
                %1497 = vst [vmem:[%s1473 + $0xb0] sm:$0xff] %v1496
                %v1498 = vld [vmem:[%s1472 + $0x60] sm:$0xff]
                %1499 = vst [vmem:[%s1473 + $0xc0] sm:$0xff] %v1498
                %v1500 = vld [vmem:[%s1472 + $0x68] sm:$0xff]
                %1501 = vst [vmem:[%s1473 + $0xd0] sm:$0xff] %v1500
                %v1502 = vld [vmem:[%s1472 + $0x70] sm:$0xff]
                %1503 = vst [vmem:[%s1473 + $0xe0] sm:$0xff] %v1502
                %v1504 = vld [vmem:[%s1472 + $0x78] sm:$0xff]
                %1505 = vst [vmem:[%s1473 + $0xf0] sm:$0xff] %v1504
              $region69: #{self_attention_nchw.1} parent=63 // loop_footer
                %s1471 = sadd.s32 1, %s1467
              $region70: #{self_attention_nchw.1} parent=63 // loop_footer_branch
                %1466 = sbr.rel target = $region66
              $region71: #{self_attention_nchw.1} parent=63 // loop_exit
                _
            $region64: #{self_attention_nchw.1} parent=55 // pred_fallthru
              _
          $region56: #{self_attention_nchw.1} parent=51 // pred_fallthru
            _
          %1550 = vnop
        $region52: #{self_attention_nchw.1} parent=43 // pred_fallthru
          _
      $region44: #{self_attention_nchw.1} parent=5 // pred_fallthru
        _
      %p1551 = scmp.le.s32.totalorder 2, %s13
      // Predicated region
      $region87: #{self_attention_nchw.1} parent=5 // pred_check
        %p1552 = pneg %p1551
      $region88: #{self_attention_nchw.1} parent=5 // pred_check_branch
        %1554 = sbr.rel (%p1552) target = $region90
      $region89: #{self_attention_nchw.1} parent=5 // pred_region
        %s1555 = ssub.s32 %s13, 2
        // Predicated region
        $region91: #{self_attention_nchw.1} parent=89 // pred_check
          %p1556 = pneg %p187
        $region92: #{self_attention_nchw.1} parent=89 // pred_check_branch
          %1558 = sbr.rel (%p1556) target = $region94
        $region93: #{self_attention_nchw.1} parent=89 // pred_region
          %s1559 = sand.u32 %s172, 1
          %s1560 = sand.u32 %s172, 1
          %s1561 = smul.addr %s1560, 128
          %s1562 = scalar_lea.vmem [#allocation4], %s1561
        $region94: #{self_attention_nchw.1} parent=89 // pred_fallthru
          _
      $region90: #{self_attention_nchw.1} parent=5 // pred_fallthru
        _
    $region6: #{self_attention_nchw.1} parent=1 // loop_footer
      %s17 = sadd.s32 1, %s13
    $region7: #{self_attention_nchw.1} parent=1 // loop_footer_branch
      %12 = sbr.rel target = $region3
    $region8: #{self_attention_nchw.1} parent=1 // loop_exit
      _

</llo_original>
